<compile_context>
chip_gen: v5e
topology: v5e:2x2
jax: 0.10.0
libtpu: 0.0.40
codegen_flags: <defaults>
</compile_context>

<pallas_src>
import collections
import functools

import jax
import jax.numpy as jnp
from jax.experimental import pallas as pl
from jax.experimental.pallas import tpu as pltpu


SlabOffsets = collections.namedtuple("SlabOffsets", ["emb", "wx", "wh", "b", "fcw", "fcb"])


def _round_up(x, m):
    return (x + m - 1) // m * m


def pack_params(emb_table, w1, b1, fc_w, fc_b):
    """One-time parameter packing (NOT in the per-call hot path).

    Slices w1/b1, transposes fc_w, pads every section to a multiple of 8 sublanes
    (so in-kernel static slices are sublane-aligned) and to lane width D, then
    concatenates everything into a single f32 slab so the kernel has exactly two
    inputs: token ids (SMEM) + this slab (VMEM).
    """
    V, D = emb_table.shape
    C = fc_w.shape[0]
    assert C <= D, "packing assumes class_num <= hid_dim"

    def pad_lanes(a):
        return jnp.pad(a, ((0, 0), (0, D - a.shape[1])))

    sections = [
        ("emb", emb_table.astype(jnp.float32)),                       # (V, D)
        ("wx", w1[:, :D].astype(jnp.float32)),                        # (D, D)
        ("wh", w1[:, D:2 * D].astype(jnp.float32)),                   # (D, D)
        ("b", b1[:, :D].astype(jnp.float32)),                         # (1, D)
        ("fcw", pad_lanes(fc_w.T.astype(jnp.float32))),               # (D, D), lanes C.. zero
        ("fcb", pad_lanes(fc_b.reshape(1, C).astype(jnp.float32))),   # (1, D)
    ]
    offs, chunks, row = {}, [], 0
    for name, mat in sections:
        offs[name] = row
        padded_rows = _round_up(mat.shape[0], 8)
        chunks.append(jnp.pad(mat, ((0, padded_rows - mat.shape[0]), (0, 0))))
        row += padded_rows
    slab = jnp.concatenate(chunks, axis=0)                            # (168, D) here
    return slab, SlabOffsets(**offs)


def _rnn_kernel(tok_ref, slab_ref, out_ref, y_ref, xbuf_ref, *,
                seq_len, batch, hid_dim, hid_num, class_num, offs):
    T, B, D, C = seq_len, batch, hid_dim, class_num

    # ---- Fused embedding gather: T*B dynamic row reads into a VMEM scratch.
    # Exact (no MXU rounding) and entirely off the serial recurrence chain.
    for i in range(T * B):
        xbuf_ref[pl.ds(i, 1), :] = slab_ref[pl.ds(offs.emb + tok_ref[i], 1), :]
    x_all = xbuf_ref[...]                                             # (T*B, D)

    wx = slab_ref[offs.wx:offs.wx + D, :]
    wh = slab_ref[offs.wh:offs.wh + D, :]
    b = slab_ref[offs.b:offs.b + 1, :]

    # ---- Batched input projection for ALL timesteps: one MXU push, no h dependency.
    xw_all = jnp.dot(x_all, wx, preferred_element_type=jnp.float32) + b   # (T*B, D)

    # ---- t == 0: PyTorch re-uses h0 (zeros) on every inner iteration -> single tanh.
    h = jnp.tanh(xw_all[0:B, :])
    out_ref[:, 0:D] = h

    # ---- t > 0: hid_num applications of the layer-0 recurrence; store h as we go.
    # TODO(synk): hold Wh resident in MXU weight regs (pltpu.matmul_push_rhs /
    #             matmul_acc_lhs / matmul_pop) and/or cast the chain dots to bf16
    #             (keeping f32 accumulation + f32 elementwise for v5e) to cut per-link
    #             MXU latency; both change numerics vs the f32 reference.
    for t in range(1, T):
        xw = xw_all[t * B:(t + 1) * B, :]
        for _ in range(hid_num):
            h = jnp.tanh(xw + jnp.dot(h, wh, preferred_element_type=jnp.float32))
        out_ref[:, t * D:(t + 1) * D] = h                             # store-as-you-go

    # ---- Epilogue: logits from the final hidden state (fc lanes C..D-1 are zero).
    fcw = slab_ref[offs.fcw:offs.fcw + D, :]
    fcb = slab_ref[offs.fcb:offs.fcb + 1, :]
    y = jnp.dot(h, fcw, preferred_element_type=jnp.float32) + fcb
    y_ref[...] = y[:, 0:C]


@functools.partial(jax.jit, static_argnames=("offs", "hid_num", "class_num"))
def rnn_forward(tokens, slab, *, offs, hid_num, class_num):
    """tokens: (T, B) int32; slab/offs from pack_params. Returns (y: (B,C), out: (B,T*D))."""
    if hid_num < 1:
        raise ValueError("hid_num must be >= 1 (h is undefined otherwise, as in the PyTorch module)")
    T, B = tokens.shape
    D = slab.shape[1]
    tok_flat = tokens.reshape(T * B).astype(jnp.int32)   # 1-D: cheap SMEM footprint

    kernel = functools.partial(_rnn_kernel, seq_len=T, batch=B, hid_dim=D,
                               hid_num=hid_num, class_num=class_num, offs=offs)

    out, y = pl.pallas_call(
        kernel,
        out_shape=(
            jax.ShapeDtypeStruct((B, T * D), jnp.float32),      # concatenated hidden states
            jax.ShapeDtypeStruct((B, class_num), jnp.float32),  # logits
        ),
        in_specs=[
            pl.BlockSpec(memory_space=pltpu.MemorySpace.SMEM),  # token ids (scalar reads)
            pl.BlockSpec(memory_space=pltpu.MemorySpace.VMEM),  # single packed param slab
        ],
        out_specs=(
            pl.BlockSpec(memory_space=pltpu.MemorySpace.VMEM),
            pl.BlockSpec(memory_space=pltpu.MemorySpace.VMEM),
        ),
        scratch_shapes=[pltpu.VMEM((T * B, D), jnp.float32)],   # gathered embeddings
        # Single grid point; whole working set < 64 KB -> fits every generation's VMEM.
        # On v7x, shard a leading batch axis with dimension_semantics=("parallel",)
        # only once B is large enough to matter (no-op at B=4).
    )(tok_flat, slab)

    return y, out


def ref_forward(tokens, emb_table, w1, b1, fc_w, fc_b, *, hid_num):
    """Pure-JAX reference mirroring the PyTorch forward exactly."""
    D = emb_table.shape[1]
    x = jnp.take(emb_table, tokens, axis=0).astype(jnp.float32)  # (T, B, D)
    Wx, Wh, b = w1[:, :D], w1[:, D:2 * D], b1[:, :D]
    outs, h = [], None
    for t in range(x.shape[0]):
        for _ in range(hid_num):
            if t == 0:
                h = jnp.tanh(x[0] @ Wx + b)  # h0 == 0 is re-used every inner iteration
            else:
                h = jnp.tanh(x[t] @ Wx + b + h @ Wh)
        outs.append(h)
    out = jnp.concatenate(outs, axis=1)
    y = h @ fc_w.T + fc_b.reshape(1, -1)
    return y, out


if __name__ == "__main__":
    # Small, deterministic config.
    emb_size = hid_dim = 32
    vocab_size = 50
    hid_num = 3
    class_num = 8
    T, B = 8, 4

    key = jax.random.PRNGKey(0)
    k_tok, k_emb, k_w1, k_fcw, k_fcb = jax.random.split(key, 5)

    tokens = jax.random.randint(k_tok, (T, B), 0, vocab_size, dtype=jnp.int32)
    emb_table = jax.random.normal(k_emb, (vocab_size, emb_size), dtype=jnp.float32)
    w1 = jax.random.normal(k_w1, (hid_dim, hid_dim * 6), dtype=jnp.float32) * 0.01
    b1 = jnp.zeros((1, hid_dim * 6), dtype=jnp.float32)
    fc_w = jax.random.normal(k_fcw, (class_num, hid_dim), dtype=jnp.float32) * 0.1
    fc_b = jax.random.normal(k_fcb, (class_num,), dtype=jnp.float32) * 0.1

    # One-time parameter packing (kept out of the per-call hot path).
    slab, offs = pack_params(emb_table, w1, b1, fc_w, fc_b)

    y, out = rnn_forward(tokens, slab, offs=offs, hid_num=hid_num, class_num=class_num)
    jax.block_until_ready((y, out))

    y_ref, out_ref_ = ref_forward(tokens, emb_table, w1, b1, fc_w, fc_b,
                                  hid_num=hid_num)
    assert y.shape == (B, class_num) and out.shape == (B, T * hid_dim)
    assert jnp.allclose(y, y_ref, atol=1e-5, rtol=1e-5), \
        float(jnp.max(jnp.abs(y - y_ref)))
    assert jnp.allclose(out, out_ref_, atol=1e-5, rtol=1e-5), \
        float(jnp.max(jnp.abs(out - out_ref_)))

    print("KERNEL_OK")
</pallas_src>

<mosaic_0001>
module attributes {stable_mosaic.version = 11 : i64} {
  func.func @_rnn_kernel(%arg0: memref<32xi32, #tpu.memory_space<smem>>, %arg1: memref<168x32xf32, #tpu.memory_space<vmem>>, %arg2: memref<4x256xf32, #tpu.memory_space<vmem>>, %arg3: memref<4x8xf32, #tpu.memory_space<vmem>>, %arg4: memref<32x32xf32, #tpu.memory_space<vmem>>) attributes {dimension_semantics = [], scalar_prefetch = 0 : i64, scratch_operands = 1 : i64, tpu.core_type = #tpu.core_type<tc>} {
    %c0 = arith.constant 0 : index
    %0 = memref.load %arg0[%c0] : memref<32xi32, #tpu.memory_space<smem>>
    %c0_i32 = arith.constant 0 : i32
    %1 = arith.addi %c0_i32, %0 : i32
    %2 = arith.index_cast %1 : i32 to index
    %c0_0 = arith.constant 0 : index
    %3 = vector.load %arg1[%2, %c0_0] : memref<168x32xf32, #tpu.memory_space<vmem>>, vector<1x32xf32>
    %c0_1 = arith.constant 0 : index
    %c0_2 = arith.constant 0 : index
    %4 = vector.load %arg4[%c0_1, %c0_2] : memref<32x32xf32, #tpu.memory_space<vmem>>, vector<1x32xf32>
    tpu.vector_store %arg4[%c0_1, %c0_2], %3 {strides = array<i32>} : memref<32x32xf32, #tpu.memory_space<vmem>>, vector<1x32xf32>,
    %c1 = arith.constant 1 : index
    %5 = memref.load %arg0[%c1] : memref<32xi32, #tpu.memory_space<smem>>
    %c0_i32_3 = arith.constant 0 : i32
    %6 = arith.addi %c0_i32_3, %5 : i32
    %7 = arith.index_cast %6 : i32 to index
    %c0_4 = arith.constant 0 : index
    %8 = vector.load %arg1[%7, %c0_4] : memref<168x32xf32, #tpu.memory_space<vmem>>, vector<1x32xf32>
    %c1_5 = arith.constant 1 : index
    %c0_6 = arith.constant 0 : index
    %9 = vector.load %arg4[%c1_5, %c0_6] : memref<32x32xf32, #tpu.memory_space<vmem>>, vector<1x32xf32>
    tpu.vector_store %arg4[%c1_5, %c0_6], %8 {strides = array<i32>} : memref<32x32xf32, #tpu.memory_space<vmem>>, vector<1x32xf32>,
    %c2 = arith.constant 2 : index
    %10 = memref.load %arg0[%c2] : memref<32xi32, #tpu.memory_space<smem>>
    %c0_i32_7 = arith.constant 0 : i32
    %11 = arith.addi %c0_i32_7, %10 : i32
    %12 = arith.index_cast %11 : i32 to index
    %c0_8 = arith.constant 0 : index
    %13 = vector.load %arg1[%12, %c0_8] : memref<168x32xf32, #tpu.memory_space<vmem>>, vector<1x32xf32>
    %c2_9 = arith.constant 2 : index
    %c0_10 = arith.constant 0 : index
    %14 = vector.load %arg4[%c2_9, %c0_10] : memref<32x32xf32, #tpu.memory_space<vmem>>, vector<1x32xf32>
    tpu.vector_store %arg4[%c2_9, %c0_10], %13 {strides = array<i32>} : memref<32x32xf32, #tpu.memory_space<vmem>>, vector<1x32xf32>,
    %c3 = arith.constant 3 : index
    %15 = memref.load %arg0[%c3] : memref<32xi32, #tpu.memory_space<smem>>
    %c0_i32_11 = arith.constant 0 : i32
    %16 = arith.addi %c0_i32_11, %15 : i32
    %17 = arith.index_cast %16 : i32 to index
    %c0_12 = arith.constant 0 : index
    %18 = vector.load %arg1[%17, %c0_12] : memref<168x32xf32, #tpu.memory_space<vmem>>, vector<1x32xf32>
    %c3_13 = arith.constant 3 : index
    %c0_14 = arith.constant 0 : index
    %19 = vector.load %arg4[%c3_13, %c0_14] : memref<32x32xf32, #tpu.memory_space<vmem>>, vector<1x32xf32>
    tpu.vector_store %arg4[%c3_13, %c0_14], %18 {strides = array<i32>} : memref<32x32xf32, #tpu.memory_space<vmem>>, vector<1x32xf32>,
    %c4 = arith.constant 4 : index
    %20 = memref.load %arg0[%c4] : memref<32xi32, #tpu.memory_space<smem>>
    %c0_i32_15 = arith.constant 0 : i32
    %21 = arith.addi %c0_i32_15, %20 : i32
    %22 = arith.index_cast %21 : i32 to index
    %c0_16 = arith.constant 0 : index
    %23 = vector.load %arg1[%22, %c0_16] : memref<168x32xf32, #tpu.memory_space<vmem>>, vector<1x32xf32>
    %c4_17 = arith.constant 4 : index
    %c0_18 = arith.constant 0 : index
    %24 = vector.load %arg4[%c4_17, %c0_18] : memref<32x32xf32, #tpu.memory_space<vmem>>, vector<1x32xf32>
    tpu.vector_store %arg4[%c4_17, %c0_18], %23 {strides = array<i32>} : memref<32x32xf32, #tpu.memory_space<vmem>>, vector<1x32xf32>,
    %c5 = arith.constant 5 : index
    %25 = memref.load %arg0[%c5] : memref<32xi32, #tpu.memory_space<smem>>
    %c0_i32_19 = arith.constant 0 : i32
    %26 = arith.addi %c0_i32_19, %25 : i32
    %27 = arith.index_cast %26 : i32 to index
    %c0_20 = arith.constant 0 : index
    %28 = vector.load %arg1[%27, %c0_20] : memref<168x32xf32, #tpu.memory_space<vmem>>, vector<1x32xf32>
    %c5_21 = arith.constant 5 : index
    %c0_22 = arith.constant 0 : index
    %29 = vector.load %arg4[%c5_21, %c0_22] : memref<32x32xf32, #tpu.memory_space<vmem>>, vector<1x32xf32>
    tpu.vector_store %arg4[%c5_21, %c0_22], %28 {strides = array<i32>} : memref<32x32xf32, #tpu.memory_space<vmem>>, vector<1x32xf32>,
    %c6 = arith.constant 6 : index
    %30 = memref.load %arg0[%c6] : memref<32xi32, #tpu.memory_space<smem>>
    %c0_i32_23 = arith.constant 0 : i32
    %31 = arith.addi %c0_i32_23, %30 : i32
    %32 = arith.index_cast %31 : i32 to index
    %c0_24 = arith.constant 0 : index
    %33 = vector.load %arg1[%32, %c0_24] : memref<168x32xf32, #tpu.memory_space<vmem>>, vector<1x32xf32>
    %c6_25 = arith.constant 6 : index
    %c0_26 = arith.constant 0 : index
    %34 = vector.load %arg4[%c6_25, %c0_26] : memref<32x32xf32, #tpu.memory_space<vmem>>, vector<1x32xf32>
    tpu.vector_store %arg4[%c6_25, %c0_26], %33 {strides = array<i32>} : memref<32x32xf32, #tpu.memory_space<vmem>>, vector<1x32xf32>,
    %c7 = arith.constant 7 : index
    %35 = memref.load %arg0[%c7] : memref<32xi32, #tpu.memory_space<smem>>
    %c0_i32_27 = arith.constant 0 : i32
    %36 = arith.addi %c0_i32_27, %35 : i32
    %37 = arith.index_cast %36 : i32 to index
    %c0_28 = arith.constant 0 : index
    %38 = vector.load %arg1[%37, %c0_28] : memref<168x32xf32, #tpu.memory_space<vmem>>, vector<1x32xf32>
    %c7_29 = arith.constant 7 : index
    %c0_30 = arith.constant 0 : index
    %39 = vector.load %arg4[%c7_29, %c0_30] : memref<32x32xf32, #tpu.memory_space<vmem>>, vector<1x32xf32>
    tpu.vector_store %arg4[%c7_29, %c0_30], %38 {strides = array<i32>} : memref<32x32xf32, #tpu.memory_space<vmem>>, vector<1x32xf32>,
    %c8 = arith.constant 8 : index
    %40 = memref.load %arg0[%c8] : memref<32xi32, #tpu.memory_space<smem>>
    %c0_i32_31 = arith.constant 0 : i32
    %41 = arith.addi %c0_i32_31, %40 : i32
    %42 = arith.index_cast %41 : i32 to index
    %c0_32 = arith.constant 0 : index
    %43 = vector.load %arg1[%42, %c0_32] : memref<168x32xf32, #tpu.memory_space<vmem>>, vector<1x32xf32>
    %c8_33 = arith.constant 8 : index
    %c0_34 = arith.constant 0 : index
    %44 = vector.load %arg4[%c8_33, %c0_34] : memref<32x32xf32, #tpu.memory_space<vmem>>, vector<1x32xf32>
    tpu.vector_store %arg4[%c8_33, %c0_34], %43 {strides = array<i32>} : memref<32x32xf32, #tpu.memory_space<vmem>>, vector<1x32xf32>,
    %c9 = arith.constant 9 : index
    %45 = memref.load %arg0[%c9] : memref<32xi32, #tpu.memory_space<smem>>
    %c0_i32_35 = arith.constant 0 : i32
    %46 = arith.addi %c0_i32_35, %45 : i32
    %47 = arith.index_cast %46 : i32 to index
    %c0_36 = arith.constant 0 : index
    %48 = vector.load %arg1[%47, %c0_36] : memref<168x32xf32, #tpu.memory_space<vmem>>, vector<1x32xf32>
    %c9_37 = arith.constant 9 : index
    %c0_38 = arith.constant 0 : index
    %49 = vector.load %arg4[%c9_37, %c0_38] : memref<32x32xf32, #tpu.memory_space<vmem>>, vector<1x32xf32>
    tpu.vector_store %arg4[%c9_37, %c0_38], %48 {strides = array<i32>} : memref<32x32xf32, #tpu.memory_space<vmem>>, vector<1x32xf32>,
    %c10 = arith.constant 10 : index
    %50 = memref.load %arg0[%c10] : memref<32xi32, #tpu.memory_space<smem>>
    %c0_i32_39 = arith.constant 0 : i32
    %51 = arith.addi %c0_i32_39, %50 : i32
    %52 = arith.index_cast %51 : i32 to index
    %c0_40 = arith.constant 0 : index
    %53 = vector.load %arg1[%52, %c0_40] : memref<168x32xf32, #tpu.memory_space<vmem>>, vector<1x32xf32>
    %c10_41 = arith.constant 10 : index
    %c0_42 = arith.constant 0 : index
    %54 = vector.load %arg4[%c10_41, %c0_42] : memref<32x32xf32, #tpu.memory_space<vmem>>, vector<1x32xf32>
    tpu.vector_store %arg4[%c10_41, %c0_42], %53 {strides = array<i32>} : memref<32x32xf32, #tpu.memory_space<vmem>>, vector<1x32xf32>,
    %c11 = arith.constant 11 : index
    %55 = memref.load %arg0[%c11] : memref<32xi32, #tpu.memory_space<smem>>
    %c0_i32_43 = arith.constant 0 : i32
    %56 = arith.addi %c0_i32_43, %55 : i32
    %57 = arith.index_cast %56 : i32 to index
    %c0_44 = arith.constant 0 : index
    %58 = vector.load %arg1[%57, %c0_44] : memref<168x32xf32, #tpu.memory_space<vmem>>, vector<1x32xf32>
    %c11_45 = arith.constant 11 : index
    %c0_46 = arith.constant 0 : index
    %59 = vector.load %arg4[%c11_45, %c0_46] : memref<32x32xf32, #tpu.memory_space<vmem>>, vector<1x32xf32>
    tpu.vector_store %arg4[%c11_45, %c0_46], %58 {strides = array<i32>} : memref<32x32xf32, #tpu.memory_space<vmem>>, vector<1x32xf32>,
    %c12 = arith.constant 12 : index
    %60 = memref.load %arg0[%c12] : memref<32xi32, #tpu.memory_space<smem>>
    %c0_i32_47 = arith.constant 0 : i32
    %61 = arith.addi %c0_i32_47, %60 : i32
    %62 = arith.index_cast %61 : i32 to index
    %c0_48 = arith.constant 0 : index
    %63 = vector.load %arg1[%62, %c0_48] : memref<168x32xf32, #tpu.memory_space<vmem>>, vector<1x32xf32>
    %c12_49 = arith.constant 12 : index
    %c0_50 = arith.constant 0 : index
    %64 = vector.load %arg4[%c12_49, %c0_50] : memref<32x32xf32, #tpu.memory_space<vmem>>, vector<1x32xf32>
    tpu.vector_store %arg4[%c12_49, %c0_50], %63 {strides = array<i32>} : memref<32x32xf32, #tpu.memory_space<vmem>>, vector<1x32xf32>,
    %c13 = arith.constant 13 : index
    %65 = memref.load %arg0[%c13] : memref<32xi32, #tpu.memory_space<smem>>
    %c0_i32_51 = arith.constant 0 : i32
    %66 = arith.addi %c0_i32_51, %65 : i32
    %67 = arith.index_cast %66 : i32 to index
    %c0_52 = arith.constant 0 : index
    %68 = vector.load %arg1[%67, %c0_52] : memref<168x32xf32, #tpu.memory_space<vmem>>, vector<1x32xf32>
    %c13_53 = arith.constant 13 : index
    %c0_54 = arith.constant 0 : index
    %69 = vector.load %arg4[%c13_53, %c0_54] : memref<32x32xf32, #tpu.memory_space<vmem>>, vector<1x32xf32>
    tpu.vector_store %arg4[%c13_53, %c0_54], %68 {strides = array<i32>} : memref<32x32xf32, #tpu.memory_space<vmem>>, vector<1x32xf32>,
    %c14 = arith.constant 14 : index
    %70 = memref.load %arg0[%c14] : memref<32xi32, #tpu.memory_space<smem>>
    %c0_i32_55 = arith.constant 0 : i32
    %71 = arith.addi %c0_i32_55, %70 : i32
    %72 = arith.index_cast %71 : i32 to index
    %c0_56 = arith.constant 0 : index
    %73 = vector.load %arg1[%72, %c0_56] : memref<168x32xf32, #tpu.memory_space<vmem>>, vector<1x32xf32>
    %c14_57 = arith.constant 14 : index
    %c0_58 = arith.constant 0 : index
    %74 = vector.load %arg4[%c14_57, %c0_58] : memref<32x32xf32, #tpu.memory_space<vmem>>, vector<1x32xf32>
    tpu.vector_store %arg4[%c14_57, %c0_58], %73 {strides = array<i32>} : memref<32x32xf32, #tpu.memory_space<vmem>>, vector<1x32xf32>,
    %c15 = arith.constant 15 : index
    %75 = memref.load %arg0[%c15] : memref<32xi32, #tpu.memory_space<smem>>
    %c0_i32_59 = arith.constant 0 : i32
    %76 = arith.addi %c0_i32_59, %75 : i32
    %77 = arith.index_cast %76 : i32 to index
    %c0_60 = arith.constant 0 : index
    %78 = vector.load %arg1[%77, %c0_60] : memref<168x32xf32, #tpu.memory_space<vmem>>, vector<1x32xf32>
    %c15_61 = arith.constant 15 : index
    %c0_62 = arith.constant 0 : index
    %79 = vector.load %arg4[%c15_61, %c0_62] : memref<32x32xf32, #tpu.memory_space<vmem>>, vector<1x32xf32>
    tpu.vector_store %arg4[%c15_61, %c0_62], %78 {strides = array<i32>} : memref<32x32xf32, #tpu.memory_space<vmem>>, vector<1x32xf32>,
    %c16 = arith.constant 16 : index
    %80 = memref.load %arg0[%c16] : memref<32xi32, #tpu.memory_space<smem>>
    %c0_i32_63 = arith.constant 0 : i32
    %81 = arith.addi %c0_i32_63, %80 : i32
    %82 = arith.index_cast %81 : i32 to index
    %c0_64 = arith.constant 0 : index
    %83 = vector.load %arg1[%82, %c0_64] : memref<168x32xf32, #tpu.memory_space<vmem>>, vector<1x32xf32>
    %c16_65 = arith.constant 16 : index
    %c0_66 = arith.constant 0 : index
    %84 = vector.load %arg4[%c16_65, %c0_66] : memref<32x32xf32, #tpu.memory_space<vmem>>, vector<1x32xf32>
    tpu.vector_store %arg4[%c16_65, %c0_66], %83 {strides = array<i32>} : memref<32x32xf32, #tpu.memory_space<vmem>>, vector<1x32xf32>,
    %c17 = arith.constant 17 : index
    %85 = memref.load %arg0[%c17] : memref<32xi32, #tpu.memory_space<smem>>
    %c0_i32_67 = arith.constant 0 : i32
    %86 = arith.addi %c0_i32_67, %85 : i32
    %87 = arith.index_cast %86 : i32 to index
    %c0_68 = arith.constant 0 : index
    %88 = vector.load %arg1[%87, %c0_68] : memref<168x32xf32, #tpu.memory_space<vmem>>, vector<1x32xf32>
    %c17_69 = arith.constant 17 : index
    %c0_70 = arith.constant 0 : index
    %89 = vector.load %arg4[%c17_69, %c0_70] : memref<32x32xf32, #tpu.memory_space<vmem>>, vector<1x32xf32>
    tpu.vector_store %arg4[%c17_69, %c0_70], %88 {strides = array<i32>} : memref<32x32xf32, #tpu.memory_space<vmem>>, vector<1x32xf32>,
    %c18 = arith.constant 18 : index
    %90 = memref.load %arg0[%c18] : memref<32xi32, #tpu.memory_space<smem>>
    %c0_i32_71 = arith.constant 0 : i32
    %91 = arith.addi %c0_i32_71, %90 : i32
    %92 = arith.index_cast %91 : i32 to index
    %c0_72 = arith.constant 0 : index
    %93 = vector.load %arg1[%92, %c0_72] : memref<168x32xf32, #tpu.memory_space<vmem>>, vector<1x32xf32>
    %c18_73 = arith.constant 18 : index
    %c0_74 = arith.constant 0 : index
    %94 = vector.load %arg4[%c18_73, %c0_74] : memref<32x32xf32, #tpu.memory_space<vmem>>, vector<1x32xf32>
    tpu.vector_store %arg4[%c18_73, %c0_74], %93 {strides = array<i32>} : memref<32x32xf32, #tpu.memory_space<vmem>>, vector<1x32xf32>,
    %c19 = arith.constant 19 : index
    %95 = memref.load %arg0[%c19] : memref<32xi32, #tpu.memory_space<smem>>
    %c0_i32_75 = arith.constant 0 : i32
    %96 = arith.addi %c0_i32_75, %95 : i32
    %97 = arith.index_cast %96 : i32 to index
    %c0_76 = arith.constant 0 : index
    %98 = vector.load %arg1[%97, %c0_76] : memref<168x32xf32, #tpu.memory_space<vmem>>, vector<1x32xf32>
    %c19_77 = arith.constant 19 : index
    %c0_78 = arith.constant 0 : index
    %99 = vector.load %arg4[%c19_77, %c0_78] : memref<32x32xf32, #tpu.memory_space<vmem>>, vector<1x32xf32>
    tpu.vector_store %arg4[%c19_77, %c0_78], %98 {strides = array<i32>} : memref<32x32xf32, #tpu.memory_space<vmem>>, vector<1x32xf32>,
    %c20 = arith.constant 20 : index
    %100 = memref.load %arg0[%c20] : memref<32xi32, #tpu.memory_space<smem>>
    %c0_i32_79 = arith.constant 0 : i32
    %101 = arith.addi %c0_i32_79, %100 : i32
    %102 = arith.index_cast %101 : i32 to index
    %c0_80 = arith.constant 0 : index
    %103 = vector.load %arg1[%102, %c0_80] : memref<168x32xf32, #tpu.memory_space<vmem>>, vector<1x32xf32>
    %c20_81 = arith.constant 20 : index
    %c0_82 = arith.constant 0 : index
    %104 = vector.load %arg4[%c20_81, %c0_82] : memref<32x32xf32, #tpu.memory_space<vmem>>, vector<1x32xf32>
    tpu.vector_store %arg4[%c20_81, %c0_82], %103 {strides = array<i32>} : memref<32x32xf32, #tpu.memory_space<vmem>>, vector<1x32xf32>,
    %c21 = arith.constant 21 : index
    %105 = memref.load %arg0[%c21] : memref<32xi32, #tpu.memory_space<smem>>
    %c0_i32_83 = arith.constant 0 : i32
    %106 = arith.addi %c0_i32_83, %105 : i32
    %107 = arith.index_cast %106 : i32 to index
    %c0_84 = arith.constant 0 : index
    %108 = vector.load %arg1[%107, %c0_84] : memref<168x32xf32, #tpu.memory_space<vmem>>, vector<1x32xf32>
    %c21_85 = arith.constant 21 : index
    %c0_86 = arith.constant 0 : index
    %109 = vector.load %arg4[%c21_85, %c0_86] : memref<32x32xf32, #tpu.memory_space<vmem>>, vector<1x32xf32>
    tpu.vector_store %arg4[%c21_85, %c0_86], %108 {strides = array<i32>} : memref<32x32xf32, #tpu.memory_space<vmem>>, vector<1x32xf32>,
    %c22 = arith.constant 22 : index
    %110 = memref.load %arg0[%c22] : memref<32xi32, #tpu.memory_space<smem>>
    %c0_i32_87 = arith.constant 0 : i32
    %111 = arith.addi %c0_i32_87, %110 : i32
    %112 = arith.index_cast %111 : i32 to index
    %c0_88 = arith.constant 0 : index
    %113 = vector.load %arg1[%112, %c0_88] : memref<168x32xf32, #tpu.memory_space<vmem>>, vector<1x32xf32>
    %c22_89 = arith.constant 22 : index
    %c0_90 = arith.constant 0 : index
    %114 = vector.load %arg4[%c22_89, %c0_90] : memref<32x32xf32, #tpu.memory_space<vmem>>, vector<1x32xf32>
    tpu.vector_store %arg4[%c22_89, %c0_90], %113 {strides = array<i32>} : memref<32x32xf32, #tpu.memory_space<vmem>>, vector<1x32xf32>,
    %c23 = arith.constant 23 : index
    %115 = memref.load %arg0[%c23] : memref<32xi32, #tpu.memory_space<smem>>
    %c0_i32_91 = arith.constant 0 : i32
    %116 = arith.addi %c0_i32_91, %115 : i32
    %117 = arith.index_cast %116 : i32 to index
    %c0_92 = arith.constant 0 : index
    %118 = vector.load %arg1[%117, %c0_92] : memref<168x32xf32, #tpu.memory_space<vmem>>, vector<1x32xf32>
    %c23_93 = arith.constant 23 : index
    %c0_94 = arith.constant 0 : index
    %119 = vector.load %arg4[%c23_93, %c0_94] : memref<32x32xf32, #tpu.memory_space<vmem>>, vector<1x32xf32>
    tpu.vector_store %arg4[%c23_93, %c0_94], %118 {strides = array<i32>} : memref<32x32xf32, #tpu.memory_space<vmem>>, vector<1x32xf32>,
    %c24 = arith.constant 24 : index
    %120 = memref.load %arg0[%c24] : memref<32xi32, #tpu.memory_space<smem>>
    %c0_i32_95 = arith.constant 0 : i32
    %121 = arith.addi %c0_i32_95, %120 : i32
    %122 = arith.index_cast %121 : i32 to index
    %c0_96 = arith.constant 0 : index
    %123 = vector.load %arg1[%122, %c0_96] : memref<168x32xf32, #tpu.memory_space<vmem>>, vector<1x32xf32>
    %c24_97 = arith.constant 24 : index
    %c0_98 = arith.constant 0 : index
    %124 = vector.load %arg4[%c24_97, %c0_98] : memref<32x32xf32, #tpu.memory_space<vmem>>, vector<1x32xf32>
    tpu.vector_store %arg4[%c24_97, %c0_98], %123 {strides = array<i32>} : memref<32x32xf32, #tpu.memory_space<vmem>>, vector<1x32xf32>,
    %c25 = arith.constant 25 : index
    %125 = memref.load %arg0[%c25] : memref<32xi32, #tpu.memory_space<smem>>
    %c0_i32_99 = arith.constant 0 : i32
    %126 = arith.addi %c0_i32_99, %125 : i32
    %127 = arith.index_cast %126 : i32 to index
    %c0_100 = arith.constant 0 : index
    %128 = vector.load %arg1[%127, %c0_100] : memref<168x32xf32, #tpu.memory_space<vmem>>, vector<1x32xf32>
    %c25_101 = arith.constant 25 : index
    %c0_102 = arith.constant 0 : index
    %129 = vector.load %arg4[%c25_101, %c0_102] : memref<32x32xf32, #tpu.memory_space<vmem>>, vector<1x32xf32>
    tpu.vector_store %arg4[%c25_101, %c0_102], %128 {strides = array<i32>} : memref<32x32xf32, #tpu.memory_space<vmem>>, vector<1x32xf32>,
    %c26 = arith.constant 26 : index
    %130 = memref.load %arg0[%c26] : memref<32xi32, #tpu.memory_space<smem>>
    %c0_i32_103 = arith.constant 0 : i32
    %131 = arith.addi %c0_i32_103, %130 : i32
    %132 = arith.index_cast %131 : i32 to index
    %c0_104 = arith.constant 0 : index
    %133 = vector.load %arg1[%132, %c0_104] : memref<168x32xf32, #tpu.memory_space<vmem>>, vector<1x32xf32>
    %c26_105 = arith.constant 26 : index
    %c0_106 = arith.constant 0 : index
    %134 = vector.load %arg4[%c26_105, %c0_106] : memref<32x32xf32, #tpu.memory_space<vmem>>, vector<1x32xf32>
    tpu.vector_store %arg4[%c26_105, %c0_106], %133 {strides = array<i32>} : memref<32x32xf32, #tpu.memory_space<vmem>>, vector<1x32xf32>,
    %c27 = arith.constant 27 : index
    %135 = memref.load %arg0[%c27] : memref<32xi32, #tpu.memory_space<smem>>
    %c0_i32_107 = arith.constant 0 : i32
    %136 = arith.addi %c0_i32_107, %135 : i32
    %137 = arith.index_cast %136 : i32 to index
    %c0_108 = arith.constant 0 : index
    %138 = vector.load %arg1[%137, %c0_108] : memref<168x32xf32, #tpu.memory_space<vmem>>, vector<1x32xf32>
    %c27_109 = arith.constant 27 : index
    %c0_110 = arith.constant 0 : index
    %139 = vector.load %arg4[%c27_109, %c0_110] : memref<32x32xf32, #tpu.memory_space<vmem>>, vector<1x32xf32>
    tpu.vector_store %arg4[%c27_109, %c0_110], %138 {strides = array<i32>} : memref<32x32xf32, #tpu.memory_space<vmem>>, vector<1x32xf32>,
    %c28 = arith.constant 28 : index
    %140 = memref.load %arg0[%c28] : memref<32xi32, #tpu.memory_space<smem>>
    %c0_i32_111 = arith.constant 0 : i32
    %141 = arith.addi %c0_i32_111, %140 : i32
    %142 = arith.index_cast %141 : i32 to index
    %c0_112 = arith.constant 0 : index
    %143 = vector.load %arg1[%142, %c0_112] : memref<168x32xf32, #tpu.memory_space<vmem>>, vector<1x32xf32>
    %c28_113 = arith.constant 28 : index
    %c0_114 = arith.constant 0 : index
    %144 = vector.load %arg4[%c28_113, %c0_114] : memref<32x32xf32, #tpu.memory_space<vmem>>, vector<1x32xf32>
    tpu.vector_store %arg4[%c28_113, %c0_114], %143 {strides = array<i32>} : memref<32x32xf32, #tpu.memory_space<vmem>>, vector<1x32xf32>,
    %c29 = arith.constant 29 : index
    %145 = memref.load %arg0[%c29] : memref<32xi32, #tpu.memory_space<smem>>
    %c0_i32_115 = arith.constant 0 : i32
    %146 = arith.addi %c0_i32_115, %145 : i32
    %147 = arith.index_cast %146 : i32 to index
    %c0_116 = arith.constant 0 : index
    %148 = vector.load %arg1[%147, %c0_116] : memref<168x32xf32, #tpu.memory_space<vmem>>, vector<1x32xf32>
    %c29_117 = arith.constant 29 : index
    %c0_118 = arith.constant 0 : index
    %149 = vector.load %arg4[%c29_117, %c0_118] : memref<32x32xf32, #tpu.memory_space<vmem>>, vector<1x32xf32>
    tpu.vector_store %arg4[%c29_117, %c0_118], %148 {strides = array<i32>} : memref<32x32xf32, #tpu.memory_space<vmem>>, vector<1x32xf32>,
    %c30 = arith.constant 30 : index
    %150 = memref.load %arg0[%c30] : memref<32xi32, #tpu.memory_space<smem>>
    %c0_i32_119 = arith.constant 0 : i32
    %151 = arith.addi %c0_i32_119, %150 : i32
    %152 = arith.index_cast %151 : i32 to index
    %c0_120 = arith.constant 0 : index
    %153 = vector.load %arg1[%152, %c0_120] : memref<168x32xf32, #tpu.memory_space<vmem>>, vector<1x32xf32>
    %c30_121 = arith.constant 30 : index
    %c0_122 = arith.constant 0 : index
    %154 = vector.load %arg4[%c30_121, %c0_122] : memref<32x32xf32, #tpu.memory_space<vmem>>, vector<1x32xf32>
    tpu.vector_store %arg4[%c30_121, %c0_122], %153 {strides = array<i32>} : memref<32x32xf32, #tpu.memory_space<vmem>>, vector<1x32xf32>,
    %c31 = arith.constant 31 : index
    %155 = memref.load %arg0[%c31] : memref<32xi32, #tpu.memory_space<smem>>
    %c0_i32_123 = arith.constant 0 : i32
    %156 = arith.addi %c0_i32_123, %155 : i32
    %157 = arith.index_cast %156 : i32 to index
    %c0_124 = arith.constant 0 : index
    %158 = vector.load %arg1[%157, %c0_124] : memref<168x32xf32, #tpu.memory_space<vmem>>, vector<1x32xf32>
    %c31_125 = arith.constant 31 : index
    %c0_126 = arith.constant 0 : index
    %159 = vector.load %arg4[%c31_125, %c0_126] : memref<32x32xf32, #tpu.memory_space<vmem>>, vector<1x32xf32>
    tpu.vector_store %arg4[%c31_125, %c0_126], %158 {strides = array<i32>} : memref<32x32xf32, #tpu.memory_space<vmem>>, vector<1x32xf32>,
    %c0_127 = arith.constant 0 : index
    %c0_128 = arith.constant 0 : index
    %160 = vector.load %arg4[%c0_127, %c0_128] : memref<32x32xf32, #tpu.memory_space<vmem>>, vector<32x32xf32>
    %c56 = arith.constant 56 : index
    %c0_129 = arith.constant 0 : index
    %161 = vector.load %arg1[%c56, %c0_129] : memref<168x32xf32, #tpu.memory_space<vmem>>, vector<32x32xf32>
    %c88 = arith.constant 88 : index
    %c0_130 = arith.constant 0 : index
    %162 = vector.load %arg1[%c88, %c0_130] : memref<168x32xf32, #tpu.memory_space<vmem>>, vector<32x32xf32>
    %c120 = arith.constant 120 : index
    %c0_131 = arith.constant 0 : index
    %163 = vector.load %arg1[%c120, %c0_131] : memref<168x32xf32, #tpu.memory_space<vmem>>, vector<1x32xf32>
    %cst = arith.constant dense<0.000000e+00> : vector<32x32xf32>
    %164 = tpu.matmul %160, %161, %cst {dimension_numbers = #tpu.dot_dimension_numbers<[1], [0], [0], [1], [0, 0, 1, 1], [], []>} : vector<32x32xf32>, vector<32x32xf32>, vector<32x32xf32> -> vector<32x32xf32>
    %165 = vector.broadcast %163 : vector<1x32xf32> to vector<32x32xf32>
    %166 = arith.addf %164, %165 : vector<32x32xf32>
    %167 = vector.extract_strided_slice %166 {offsets = [0, 0], sizes = [4, 32], strides = [1, 1]} : vector<32x32xf32> to vector<4x32xf32>
    %168 = math.tanh %167 : vector<4x32xf32>
    %c0_132 = arith.constant 0 : index
    %c0_133 = arith.constant 0 : index
    %169 = vector.load %arg2[%c0_132, %c0_133] : memref<4x256xf32, #tpu.memory_space<vmem>>, vector<4x32xf32>
    tpu.vector_store %arg2[%c0_132, %c0_133], %168 {strides = array<i32>} : memref<4x256xf32, #tpu.memory_space<vmem>>, vector<4x32xf32>,
    %170 = vector.extract_strided_slice %166 {offsets = [4, 0], sizes = [4, 32], strides = [1, 1]} : vector<32x32xf32> to vector<4x32xf32>
    %cst_134 = arith.constant dense<0.000000e+00> : vector<4x32xf32>
    %171 = tpu.matmul %168, %162, %cst_134 {dimension_numbers = #tpu.dot_dimension_numbers<[1], [0], [0], [1], [0, 0, 1, 1], [], []>} : vector<4x32xf32>, vector<32x32xf32>, vector<4x32xf32> -> vector<4x32xf32>
    %172 = arith.addf %170, %171 : vector<4x32xf32>
    %173 = math.tanh %172 : vector<4x32xf32>
    %cst_135 = arith.constant dense<0.000000e+00> : vector<4x32xf32>
    %174 = tpu.matmul %173, %162, %cst_135 {dimension_numbers = #tpu.dot_dimension_numbers<[1], [0], [0], [1], [0, 0, 1, 1], [], []>} : vector<4x32xf32>, vector<32x32xf32>, vector<4x32xf32> -> vector<4x32xf32>
    %175 = arith.addf %170, %174 : vector<4x32xf32>
    %176 = math.tanh %175 : vector<4x32xf32>
    %cst_136 = arith.constant dense<0.000000e+00> : vector<4x32xf32>
    %177 = tpu.matmul %176, %162, %cst_136 {dimension_numbers = #tpu.dot_dimension_numbers<[1], [0], [0], [1], [0, 0, 1, 1], [], []>} : vector<4x32xf32>, vector<32x32xf32>, vector<4x32xf32> -> vector<4x32xf32>
    %178 = arith.addf %170, %177 : vector<4x32xf32>
    %179 = math.tanh %178 : vector<4x32xf32>
    %c0_137 = arith.constant 0 : index
    %c32 = arith.constant 32 : index
    %180 = vector.load %arg2[%c0_137, %c32] : memref<4x256xf32, #tpu.memory_space<vmem>>, vector<4x32xf32>
    tpu.vector_store %arg2[%c0_137, %c32], %179 {strides = array<i32>} : memref<4x256xf32, #tpu.memory_space<vmem>>, vector<4x32xf32>,
    %181 = vector.extract_strided_slice %166 {offsets = [8, 0], sizes = [4, 32], strides = [1, 1]} : vector<32x32xf32> to vector<4x32xf32>
    %cst_138 = arith.constant dense<0.000000e+00> : vector<4x32xf32>
    %182 = tpu.matmul %179, %162, %cst_138 {dimension_numbers = #tpu.dot_dimension_numbers<[1], [0], [0], [1], [0, 0, 1, 1], [], []>} : vector<4x32xf32>, vector<32x32xf32>, vector<4x32xf32> -> vector<4x32xf32>
    %183 = arith.addf %181, %182 : vector<4x32xf32>
    %184 = math.tanh %183 : vector<4x32xf32>
    %cst_139 = arith.constant dense<0.000000e+00> : vector<4x32xf32>
    %185 = tpu.matmul %184, %162, %cst_139 {dimension_numbers = #tpu.dot_dimension_numbers<[1], [0], [0], [1], [0, 0, 1, 1], [], []>} : vector<4x32xf32>, vector<32x32xf32>, vector<4x32xf32> -> vector<4x32xf32>
    %186 = arith.addf %181, %185 : vector<4x32xf32>
    %187 = math.tanh %186 : vector<4x32xf32>
    %cst_140 = arith.constant dense<0.000000e+00> : vector<4x32xf32>
    %188 = tpu.matmul %187, %162, %cst_140 {dimension_numbers = #tpu.dot_dimension_numbers<[1], [0], [0], [1], [0, 0, 1, 1], [], []>} : vector<4x32xf32>, vector<32x32xf32>, vector<4x32xf32> -> vector<4x32xf32>
    %189 = arith.addf %181, %188 : vector<4x32xf32>
    %190 = math.tanh %189 : vector<4x32xf32>
    %c0_141 = arith.constant 0 : index
    %c64 = arith.constant 64 : index
    %191 = vector.load %arg2[%c0_141, %c64] : memref<4x256xf32, #tpu.memory_space<vmem>>, vector<4x32xf32>
    tpu.vector_store %arg2[%c0_141, %c64], %190 {strides = array<i32>} : memref<4x256xf32, #tpu.memory_space<vmem>>, vector<4x32xf32>,
    %192 = vector.extract_strided_slice %166 {offsets = [12, 0], sizes = [4, 32], strides = [1, 1]} : vector<32x32xf32> to vector<4x32xf32>
    %cst_142 = arith.constant dense<0.000000e+00> : vector<4x32xf32>
    %193 = tpu.matmul %190, %162, %cst_142 {dimension_numbers = #tpu.dot_dimension_numbers<[1], [0], [0], [1], [0, 0, 1, 1], [], []>} : vector<4x32xf32>, vector<32x32xf32>, vector<4x32xf32> -> vector<4x32xf32>
    %194 = arith.addf %192, %193 : vector<4x32xf32>
    %195 = math.tanh %194 : vector<4x32xf32>
    %cst_143 = arith.constant dense<0.000000e+00> : vector<4x32xf32>
    %196 = tpu.matmul %195, %162, %cst_143 {dimension_numbers = #tpu.dot_dimension_numbers<[1], [0], [0], [1], [0, 0, 1, 1], [], []>} : vector<4x32xf32>, vector<32x32xf32>, vector<4x32xf32> -> vector<4x32xf32>
    %197 = arith.addf %192, %196 : vector<4x32xf32>
    %198 = math.tanh %197 : vector<4x32xf32>
    %cst_144 = arith.constant dense<0.000000e+00> : vector<4x32xf32>
    %199 = tpu.matmul %198, %162, %cst_144 {dimension_numbers = #tpu.dot_dimension_numbers<[1], [0], [0], [1], [0, 0, 1, 1], [], []>} : vector<4x32xf32>, vector<32x32xf32>, vector<4x32xf32> -> vector<4x32xf32>
    %200 = arith.addf %192, %199 : vector<4x32xf32>
    %201 = math.tanh %200 : vector<4x32xf32>
    %c0_145 = arith.constant 0 : index
    %c96 = arith.constant 96 : index
    %202 = vector.load %arg2[%c0_145, %c96] : memref<4x256xf32, #tpu.memory_space<vmem>>, vector<4x32xf32>
    tpu.vector_store %arg2[%c0_145, %c96], %201 {strides = array<i32>} : memref<4x256xf32, #tpu.memory_space<vmem>>, vector<4x32xf32>,
    %203 = vector.extract_strided_slice %166 {offsets = [16, 0], sizes = [4, 32], strides = [1, 1]} : vector<32x32xf32> to vector<4x32xf32>
    %cst_146 = arith.constant dense<0.000000e+00> : vector<4x32xf32>
    %204 = tpu.matmul %201, %162, %cst_146 {dimension_numbers = #tpu.dot_dimension_numbers<[1], [0], [0], [1], [0, 0, 1, 1], [], []>} : vector<4x32xf32>, vector<32x32xf32>, vector<4x32xf32> -> vector<4x32xf32>
    %205 = arith.addf %203, %204 : vector<4x32xf32>
    %206 = math.tanh %205 : vector<4x32xf32>
    %cst_147 = arith.constant dense<0.000000e+00> : vector<4x32xf32>
    %207 = tpu.matmul %206, %162, %cst_147 {dimension_numbers = #tpu.dot_dimension_numbers<[1], [0], [0], [1], [0, 0, 1, 1], [], []>} : vector<4x32xf32>, vector<32x32xf32>, vector<4x32xf32> -> vector<4x32xf32>
    %208 = arith.addf %203, %207 : vector<4x32xf32>
    %209 = math.tanh %208 : vector<4x32xf32>
    %cst_148 = arith.constant dense<0.000000e+00> : vector<4x32xf32>
    %210 = tpu.matmul %209, %162, %cst_148 {dimension_numbers = #tpu.dot_dimension_numbers<[1], [0], [0], [1], [0, 0, 1, 1], [], []>} : vector<4x32xf32>, vector<32x32xf32>, vector<4x32xf32> -> vector<4x32xf32>
    %211 = arith.addf %203, %210 : vector<4x32xf32>
    %212 = math.tanh %211 : vector<4x32xf32>
    %c0_149 = arith.constant 0 : index
    %c128 = arith.constant 128 : index
    %213 = vector.load %arg2[%c0_149, %c128] : memref<4x256xf32, #tpu.memory_space<vmem>>, vector<4x32xf32>
    tpu.vector_store %arg2[%c0_149, %c128], %212 {strides = array<i32>} : memref<4x256xf32, #tpu.memory_space<vmem>>, vector<4x32xf32>,
    %214 = vector.extract_strided_slice %166 {offsets = [20, 0], sizes = [4, 32], strides = [1, 1]} : vector<32x32xf32> to vector<4x32xf32>
    %cst_150 = arith.constant dense<0.000000e+00> : vector<4x32xf32>
    %215 = tpu.matmul %212, %162, %cst_150 {dimension_numbers = #tpu.dot_dimension_numbers<[1], [0], [0], [1], [0, 0, 1, 1], [], []>} : vector<4x32xf32>, vector<32x32xf32>, vector<4x32xf32> -> vector<4x32xf32>
    %216 = arith.addf %214, %215 : vector<4x32xf32>
    %217 = math.tanh %216 : vector<4x32xf32>
    %cst_151 = arith.constant dense<0.000000e+00> : vector<4x32xf32>
    %218 = tpu.matmul %217, %162, %cst_151 {dimension_numbers = #tpu.dot_dimension_numbers<[1], [0], [0], [1], [0, 0, 1, 1], [], []>} : vector<4x32xf32>, vector<32x32xf32>, vector<4x32xf32> -> vector<4x32xf32>
    %219 = arith.addf %214, %218 : vector<4x32xf32>
    %220 = math.tanh %219 : vector<4x32xf32>
    %cst_152 = arith.constant dense<0.000000e+00> : vector<4x32xf32>
    %221 = tpu.matmul %220, %162, %cst_152 {dimension_numbers = #tpu.dot_dimension_numbers<[1], [0], [0], [1], [0, 0, 1, 1], [], []>} : vector<4x32xf32>, vector<32x32xf32>, vector<4x32xf32> -> vector<4x32xf32>
    %222 = arith.addf %214, %221 : vector<4x32xf32>
    %223 = math.tanh %222 : vector<4x32xf32>
    %c0_153 = arith.constant 0 : index
    %c160 = arith.constant 160 : index
    %224 = vector.load %arg2[%c0_153, %c160] : memref<4x256xf32, #tpu.memory_space<vmem>>, vector<4x32xf32>
    tpu.vector_store %arg2[%c0_153, %c160], %223 {strides = array<i32>} : memref<4x256xf32, #tpu.memory_space<vmem>>, vector<4x32xf32>,
    %225 = vector.extract_strided_slice %166 {offsets = [24, 0], sizes = [4, 32], strides = [1, 1]} : vector<32x32xf32> to vector<4x32xf32>
    %cst_154 = arith.constant dense<0.000000e+00> : vector<4x32xf32>
    %226 = tpu.matmul %223, %162, %cst_154 {dimension_numbers = #tpu.dot_dimension_numbers<[1], [0], [0], [1], [0, 0, 1, 1], [], []>} : vector<4x32xf32>, vector<32x32xf32>, vector<4x32xf32> -> vector<4x32xf32>
    %227 = arith.addf %225, %226 : vector<4x32xf32>
    %228 = math.tanh %227 : vector<4x32xf32>
    %cst_155 = arith.constant dense<0.000000e+00> : vector<4x32xf32>
    %229 = tpu.matmul %228, %162, %cst_155 {dimension_numbers = #tpu.dot_dimension_numbers<[1], [0], [0], [1], [0, 0, 1, 1], [], []>} : vector<4x32xf32>, vector<32x32xf32>, vector<4x32xf32> -> vector<4x32xf32>
    %230 = arith.addf %225, %229 : vector<4x32xf32>
    %231 = math.tanh %230 : vector<4x32xf32>
    %cst_156 = arith.constant dense<0.000000e+00> : vector<4x32xf32>
    %232 = tpu.matmul %231, %162, %cst_156 {dimension_numbers = #tpu.dot_dimension_numbers<[1], [0], [0], [1], [0, 0, 1, 1], [], []>} : vector<4x32xf32>, vector<32x32xf32>, vector<4x32xf32> -> vector<4x32xf32>
    %233 = arith.addf %225, %232 : vector<4x32xf32>
    %234 = math.tanh %233 : vector<4x32xf32>
    %c0_157 = arith.constant 0 : index
    %c192 = arith.constant 192 : index
    %235 = vector.load %arg2[%c0_157, %c192] : memref<4x256xf32, #tpu.memory_space<vmem>>, vector<4x32xf32>
    tpu.vector_store %arg2[%c0_157, %c192], %234 {strides = array<i32>} : memref<4x256xf32, #tpu.memory_space<vmem>>, vector<4x32xf32>,
    %236 = vector.extract_strided_slice %166 {offsets = [28, 0], sizes = [4, 32], strides = [1, 1]} : vector<32x32xf32> to vector<4x32xf32>
    %cst_158 = arith.constant dense<0.000000e+00> : vector<4x32xf32>
    %237 = tpu.matmul %234, %162, %cst_158 {dimension_numbers = #tpu.dot_dimension_numbers<[1], [0], [0], [1], [0, 0, 1, 1], [], []>} : vector<4x32xf32>, vector<32x32xf32>, vector<4x32xf32> -> vector<4x32xf32>
    %238 = arith.addf %236, %237 : vector<4x32xf32>
    %239 = math.tanh %238 : vector<4x32xf32>
    %cst_159 = arith.constant dense<0.000000e+00> : vector<4x32xf32>
    %240 = tpu.matmul %239, %162, %cst_159 {dimension_numbers = #tpu.dot_dimension_numbers<[1], [0], [0], [1], [0, 0, 1, 1], [], []>} : vector<4x32xf32>, vector<32x32xf32>, vector<4x32xf32> -> vector<4x32xf32>
    %241 = arith.addf %236, %240 : vector<4x32xf32>
    %242 = math.tanh %241 : vector<4x32xf32>
    %cst_160 = arith.constant dense<0.000000e+00> : vector<4x32xf32>
    %243 = tpu.matmul %242, %162, %cst_160 {dimension_numbers = #tpu.dot_dimension_numbers<[1], [0], [0], [1], [0, 0, 1, 1], [], []>} : vector<4x32xf32>, vector<32x32xf32>, vector<4x32xf32> -> vector<4x32xf32>
    %244 = arith.addf %236, %243 : vector<4x32xf32>
    %245 = math.tanh %244 : vector<4x32xf32>
    %c0_161 = arith.constant 0 : index
    %c224 = arith.constant 224 : index
    %246 = vector.load %arg2[%c0_161, %c224] : memref<4x256xf32, #tpu.memory_space<vmem>>, vector<4x32xf32>
    tpu.vector_store %arg2[%c0_161, %c224], %245 {strides = array<i32>} : memref<4x256xf32, #tpu.memory_space<vmem>>, vector<4x32xf32>,
    %c128_162 = arith.constant 128 : index
    %c0_163 = arith.constant 0 : index
    %247 = vector.load %arg1[%c128_162, %c0_163] : memref<168x32xf32, #tpu.memory_space<vmem>>, vector<32x32xf32>
    %c160_164 = arith.constant 160 : index
    %c0_165 = arith.constant 0 : index
    %248 = vector.load %arg1[%c160_164, %c0_165] : memref<168x32xf32, #tpu.memory_space<vmem>>, vector<1x32xf32>
    %cst_166 = arith.constant dense<0.000000e+00> : vector<4x32xf32>
    %249 = tpu.matmul %245, %247, %cst_166 {dimension_numbers = #tpu.dot_dimension_numbers<[1], [0], [0], [1], [0, 0, 1, 1], [], []>} : vector<4x32xf32>, vector<32x32xf32>, vector<4x32xf32> -> vector<4x32xf32>
    %250 = vector.broadcast %248 : vector<1x32xf32> to vector<4x32xf32>
    %251 = arith.addf %249, %250 : vector<4x32xf32>
    %252 = vector.extract_strided_slice %251 {offsets = [0, 0], sizes = [4, 8], strides = [1, 1]} : vector<4x32xf32> to vector<4x8xf32>
    %c0_167 = arith.constant 0 : index
    %c0_168 = arith.constant 0 : index
    %253 = vector.load %arg3[%c0_167, %c0_168] : memref<4x8xf32, #tpu.memory_space<vmem>>, vector<4x8xf32>
    tpu.vector_store %arg3[%c0_167, %c0_168], %252 {strides = array<i32>} : memref<4x8xf32, #tpu.memory_space<vmem>>, vector<4x8xf32>,
    return
  }
}

</mosaic_0001>

<llo_original>
// kernel: rnn_forward.1
$region0: #{rnn_forward.1}
  #allocation0 [shape = 'u32[]', space=smem, size = 0x4, offset = 0x4, fixed_abs, tag = 'smem constant byte address 0x4 - core index']
  #allocation1 [shape = 'u32[72,128]{1,0:T(1,128)}', space=vmem, size = 0x9000, scoped, tag = 'internal scratch']
  #allocation2 [shape = 'f32[32,32]{1,0:T(8,128)}', space=vmem, size = 0x4000, scoped, tag = 'scratch operand']
  %s0 = inlined_call_operand.vmem [shape: s32[32], index: 0, kind: input, shape index: {}]
  %s1 = inlined_call_operand.vmem [shape: f32[168,32], index: 1, kind: input, shape index: {}]
  %s2 = inlined_call_operand.hbm [shape: f32[4,256], index: 2, kind: output, shape index: {0}]
  %s3 = inlined_call_operand.hbm [shape: f32[4,8], index: 3, kind: output, shape index: {1}]
  %4 = xla_tuple %s2, %s3
  %s5 = sld [smem:[#allocation0]]
  $region30: #{rnn_forward.1} parent=0
    _
  %s7 = ssub.s32 1, %s5
  %s8 = scalar_select 0, %s7, %s5
  $region1: #{rnn_forward.1} parent=0
    #allocation3 [shape = 'u8[512]{0}', space=smem, size = 0x200, scoped, tag = 'input window, operand 0, single buffered']
    #allocation4 [shape = 's32[1]{0}', space=sflag, size = 0x4, scoped, tag = 'scoped memory for rnn_forward.1']
    #allocation5 [shape = 's32[1]{0}', space=sflag, size = 0x4, scoped, tag = 'scoped memory for rnn_forward.1']
    #allocation6 [shape = 'u8[4096]{0}', space=vmem, size = 0x1000, scoped, tag = 'output window, operand 0, single buffered']
    #allocation7 [shape = 'u8[2048]{0}', space=vmem, size = 0x800, scoped, tag = 'output window, operand 1, single buffered']
    #allocation8 [shape = 's32[1]{0}', space=sflag, size = 0x4, scoped, tag = 'scoped memory for rnn_forward.1']
    %9 = vsyncpa [#allocation5], 0
    %10 = vsyncpa [#allocation4], 0
    %11 = vsyncpa [#allocation8], 0
    // Predicated region
    $region2: #{rnn_forward.1} parent=1 // pred_check
      _
    $region3: #{rnn_forward.1} parent=1 // pred_check_branch
      %13 = sbr.rel (0) target = $region5
    $region4: #{rnn_forward.1} parent=1 // pred_region
      %15 = vsyncadd [#allocation5], 0
      %s17 = sshll.u32 %s0, 4
      %s18 = int_to_ptr.vmem [resolvable:$true] %s17
      %20 = dma.vmem_to_smem %s18, 16, [#allocation3], [#allocation5]
    $region5: #{rnn_forward.1} parent=1 // pred_fallthru
      _
    // Predicated region
    $region6: #{rnn_forward.1} parent=1 // pred_check
      _
    $region7: #{rnn_forward.1} parent=1 // pred_check_branch
      %22 = sbr.rel (0) target = $region9
    $region8: #{rnn_forward.1} parent=1 // pred_region
      _
    $region9: #{rnn_forward.1} parent=1 // pred_fallthru
      _
    // Predicated region
    $region10: #{rnn_forward.1} parent=1 // pred_check
      _
    $region11: #{rnn_forward.1} parent=1 // pred_check_branch
      %24 = sbr.rel (0) target = $region13
    $region12: #{rnn_forward.1} parent=1 // pred_region
      %26 = dma.done [#allocation5], 16
    $region13: #{rnn_forward.1} parent=1 // pred_fallthru
      _
    %27 = sfence
    %s28 = sld [smem:[#allocation3]]
    %s29 = scalar_lea.vmem %s1, %s28
    %v30 = vld [vmem:[%s29] sm:$0x1]
    %vm31 = vcmask 253952
    %32 = vst.msk [vmem:[#allocation2] sm:$0x1] %vm31, %v30
    %s33 = sld [smem:[#allocation3 + $0x1]]
    %s34 = scalar_lea.vmem %s1, %s33
    %v35 = vld [vmem:[%s34] sm:$0x1]
    %36 = vst.msk [vmem:[#allocation2 + $0x1] sm:$0x1] %vm31, %v35
    %s37 = sld [smem:[#allocation3 + $0x2]]
    %s38 = scalar_lea.vmem %s1, %s37
    %v39 = vld [vmem:[%s38] sm:$0x1]
    %40 = vst.msk [vmem:[#allocation2 + $0x2] sm:$0x1] %vm31, %v39
    %s41 = sld [smem:[#allocation3 + $0x3]]
    %s42 = scalar_lea.vmem %s1, %s41
    %v43 = vld [vmem:[%s42] sm:$0x1]
    %44 = vst.msk [vmem:[#allocation2 + $0x3] sm:$0x1] %vm31, %v43
    %s45 = sld [smem:[#allocation3 + $0x4]]
    %s46 = scalar_lea.vmem %s1, %s45
    %v47 = vld [vmem:[%s46] sm:$0x1]
    %48 = vst.msk [vmem:[#allocation2 + $0x4] sm:$0x1] %vm31, %v47
    %s49 = sld [smem:[#allocation3 + $0x5]]
    %s50 = scalar_lea.vmem %s1, %s49
    %v51 = vld [vmem:[%s50] sm:$0x1]
    %52 = vst.msk [vmem:[#allocation2 + $0x5] sm:$0x1] %vm31, %v51
    %s53 = sld [smem:[#allocation3 + $0x6]]
    %s54 = scalar_lea.vmem %s1, %s53
    %v55 = vld [vmem:[%s54] sm:$0x1]
    %56 = vst.msk [vmem:[#allocation2 + $0x6] sm:$0x1] %vm31, %v55
    %s57 = sld [smem:[#allocation3 + $0x7]]
    %s58 = scalar_lea.vmem %s1, %s57
    %v59 = vld [vmem:[%s58] sm:$0x1]
    %60 = vst.msk [vmem:[#allocation2 + $0x7] sm:$0x1] %vm31, %v59
    %s61 = sld [smem:[#allocation3 + $0x8]]
    %s62 = scalar_lea.vmem %s1, %s61
    %v63 = vld [vmem:[%s62] sm:$0x1]
    %64 = vst.msk [vmem:[#allocation2 + $0x8] sm:$0x1] %vm31, %v63
    %s65 = sld [smem:[#allocation3 + $0x9]]
    %s66 = scalar_lea.vmem %s1, %s65
    %v67 = vld [vmem:[%s66] sm:$0x1]
    %68 = vst.msk [vmem:[#allocation2 + $0x9] sm:$0x1] %vm31, %v67
    %s69 = sld [smem:[#allocation3 + $0xa]]
    %s70 = scalar_lea.vmem %s1, %s69
    %v71 = vld [vmem:[%s70] sm:$0x1]
    %72 = vst.msk [vmem:[#allocation2 + $0xa] sm:$0x1] %vm31, %v71
    %s73 = sld [smem:[#allocation3 + $0xb]]
    %s74 = scalar_lea.vmem %s1, %s73
    %v75 = vld [vmem:[%s74] sm:$0x1]
    %76 = vst.msk [vmem:[#allocation2 + $0xb] sm:$0x1] %vm31, %v75
    %s77 = sld [smem:[#allocation3 + $0xc]]
    %s78 = scalar_lea.vmem %s1, %s77
    %v79 = vld [vmem:[%s78] sm:$0x1]
    %80 = vst.msk [vmem:[#allocation2 + $0xc] sm:$0x1] %vm31, %v79
    %s81 = sld [smem:[#allocation3 + $0xd]]
    %s82 = scalar_lea.vmem %s1, %s81
    %v83 = vld [vmem:[%s82] sm:$0x1]
    %84 = vst.msk [vmem:[#allocation2 + $0xd] sm:$0x1] %vm31, %v83
    %s85 = sld [smem:[#allocation3 + $0xe]]
    %s86 = scalar_lea.vmem %s1, %s85
    %v87 = vld [vmem:[%s86] sm:$0x1]
    %88 = vst.msk [vmem:[#allocation2 + $0xe] sm:$0x1] %vm31, %v87
    %s89 = sld [smem:[#allocation3 + $0xf]]
    %s90 = scalar_lea.vmem %s1, %s89
    %v91 = vld [vmem:[%s90] sm:$0x1]
    %92 = vst.msk [vmem:[#allocation2 + $0xf] sm:$0x1] %vm31, %v91
    %s93 = sld [smem:[#allocation3 + $0x10]]
    %s94 = scalar_lea.vmem %s1, %s93
    %v95 = vld [vmem:[%s94] sm:$0x1]
    %96 = vst.msk [vmem:[#allocation2 + $0x10] sm:$0x1] %vm31, %v95
    %s97 = sld [smem:[#allocation3 + $0x11]]
    %s98 = scalar_lea.vmem %s1, %s97
    %v99 = vld [vmem:[%s98] sm:$0x1]
    %100 = vst.msk [vmem:[#allocation2 + $0x11] sm:$0x1] %vm31, %v99
    %s101 = sld [smem:[#allocation3 + $0x12]]
    %s102 = scalar_lea.vmem %s1, %s101
    %v103 = vld [vmem:[%s102] sm:$0x1]
    %104 = vst.msk [vmem:[#allocation2 + $0x12] sm:$0x1] %vm31, %v103
    %s105 = sld [smem:[#allocation3 + $0x13]]
    %s106 = scalar_lea.vmem %s1, %s105
    %v107 = vld [vmem:[%s106] sm:$0x1]
    %108 = vst.msk [vmem:[#allocation2 + $0x13] sm:$0x1] %vm31, %v107
    %s109 = sld [smem:[#allocation3 + $0x14]]
    %s110 = scalar_lea.vmem %s1, %s109
    %v111 = vld [vmem:[%s110] sm:$0x1]
    %112 = vst.msk [vmem:[#allocation2 + $0x14] sm:$0x1] %vm31, %v111
    %s113 = sld [smem:[#allocation3 + $0x15]]
    %s114 = scalar_lea.vmem %s1, %s113
    %v115 = vld [vmem:[%s114] sm:$0x1]
    %116 = vst.msk [vmem:[#allocation2 + $0x15] sm:$0x1] %vm31, %v115
    %s117 = sld [smem:[#allocation3 + $0x16]]
    %s118 = scalar_lea.vmem %s1, %s117
    %v119 = vld [vmem:[%s118] sm:$0x1]
    %120 = vst.msk [vmem:[#allocation2 + $0x16] sm:$0x1] %vm31, %v119
    %s121 = sld [smem:[#allocation3 + $0x17]]
    %s122 = scalar_lea.vmem %s1, %s121
    %v123 = vld [vmem:[%s122] sm:$0x1]
    %124 = vst.msk [vmem:[#allocation2 + $0x17] sm:$0x1] %vm31, %v123
    %s125 = sld [smem:[#allocation3 + $0x18]]
    %s126 = scalar_lea.vmem %s1, %s125
    %v127 = vld [vmem:[%s126] sm:$0x1]
    %128 = vst.msk [vmem:[#allocation2 + $0x18] sm:$0x1] %vm31, %v127
    %s129 = sld [smem:[#allocation3 + $0x19]]
    %s130 = scalar_lea.vmem %s1, %s129
    %v131 = vld [vmem:[%s130] sm:$0x1]
    %132 = vst.msk [vmem:[#allocation2 + $0x19] sm:$0x1] %vm31, %v131
    %s133 = sld [smem:[#allocation3 + $0x1a]]
    %s134 = scalar_lea.vmem %s1, %s133
    %v135 = vld [vmem:[%s134] sm:$0x1]
    %136 = vst.msk [vmem:[#allocation2 + $0x1a] sm:$0x1] %vm31, %v135
    %s137 = sld [smem:[#allocation3 + $0x1b]]
    %s138 = scalar_lea.vmem %s1, %s137
    %v139 = vld [vmem:[%s138] sm:$0x1]
    %140 = vst.msk [vmem:[#allocation2 + $0x1b] sm:$0x1] %vm31, %v139
    %s141 = sld [smem:[#allocation3 + $0x1c]]
    %s142 = scalar_lea.vmem %s1, %s141
    %v143 = vld [vmem:[%s142] sm:$0x1]
    %144 = vst.msk [vmem:[#allocation2 + $0x1c] sm:$0x1] %vm31, %v143
    %s145 = sld [smem:[#allocation3 + $0x1d]]
    %s146 = scalar_lea.vmem %s1, %s145
    %v147 = vld [vmem:[%s146] sm:$0x1]
    %148 = vst.msk [vmem:[#allocation2 + $0x1d] sm:$0x1] %vm31, %v147
    %s149 = sld [smem:[#allocation3 + $0x1e]]
    %s150 = scalar_lea.vmem %s1, %s149
    %v151 = vld [vmem:[%s150] sm:$0x1]
    %152 = vst.msk [vmem:[#allocation2 + $0x1e] sm:$0x1] %vm31, %v151
    %s153 = sld [smem:[#allocation3 + $0x1f]]
    %s154 = scalar_lea.vmem %s1, %s153
    %v155 = vld [vmem:[%s154] sm:$0x1]
    %156 = vst.msk [vmem:[#allocation2 + $0x1f] sm:$0x1] %vm31, %v155
    %v157 = vld [vmem:[#allocation2] sm:$0xff]
    %v158 = vld [vmem:[#allocation2 + $0x8] sm:$0xff]
    %v159 = vld [vmem:[#allocation2 + $0x10] sm:$0xff]
    %v160 = vld [vmem:[#allocation2 + $0x18] sm:$0xff]
    %v161 = vld [vmem:[%s1 + $0x38] sm:$0xff]
    %v162 = vld [vmem:[%s1 + $0x40] sm:$0xff]
    %v163 = vld [vmem:[%s1 + $0x48] sm:$0xff]
    %v164 = vld [vmem:[%s1 + $0x50] sm:$0xff]
    %v165 = vld [vmem:[%s1 + $0x58] sm:$0xff]
    %v166 = vld [vmem:[%s1 + $0x60] sm:$0xff]
    %v167 = vld [vmem:[%s1 + $0x68] sm:$0xff]
    %v168 = vld [vmem:[%s1 + $0x70] sm:$0xff]
    %v169 = vld [vmem:[%s1 + $0x78] sm:$0x1]
    %v170 = vperm.slane %v169, 0
    %vm171 = vcmask 261120
    %v173 = vsel %vm171, %v157, 0
    %v176 = vsel %vm171, %v158, 0
    %v179 = vsel %vm171, %v159, 0
    %v182 = vsel %vm171, %v160, 0
    %184 = vmatpush.msra.mxu0 0.0
    %185 = vmatpush.msra.mxu0 0.0
    %186 = vmatpush.msra.mxu0 0.0
    %187 = vmatpush.msra.mxu0 0.0
    %188 = vmatpush.msra.mxu0 0.0
    %189 = vmatpush.msra.mxu0 0.0
    %190 = vmatpush.msra.mxu0 0.0
    %191 = vmatpush.msra.mxu0 0.0
    %192 = vmatpush.msra.mxu0 0.0
    %193 = vmatpush.msra.mxu0 0.0
    %194 = vmatpush.msra.mxu0 0.0
    %195 = vmatpush.msra.mxu0 0.0
    %196 = vmatpush.msra.mxu0 %v164
    %197 = vmatpush.msra.mxu0 %v163
    %198 = vmatpush.msra.mxu0 %v162
    %199 = vmatpush.msra.mxu0 %v161
    %200 = vmatmul.f32.gmra.mxu0 %v173
    %v201 = vpop.f32.mrf.mxu0
    %v202 = vadd.f32 %v170, %v201
    %203 = vmatmul.f32.gmra.mxu0 %v176
    %v204 = vpop.f32.mrf.mxu0
    %v205 = vadd.f32 %v170, %v204
    %206 = vmatmul.f32.gmra.mxu0 %v179
    %v207 = vpop.f32.mrf.mxu0
    %v208 = vadd.f32 %v170, %v207
    %209 = vmatmul.f32.gmra.mxu0 %v182
    %v210 = vpop.f32.mrf.mxu0
    %v211 = vadd.f32 %v170, %v210
    %212 = vdwg.mxu0
    %v213 = vtanh.pop %v202
    %vm214 = vcmask 257024
    %215 = vst.msk [vmem:[#allocation6] sm:$0xf] %vm214, %v213
    %v217 = vsel %vm171, %v213, 0
    %219 = vmatpush.msra.mxu0 0.0
    %220 = vmatpush.msra.mxu0 0.0
    %221 = vmatpush.msra.mxu0 0.0
    %222 = vmatpush.msra.mxu0 0.0
    %223 = vmatpush.msra.mxu0 0.0
    %224 = vmatpush.msra.mxu0 0.0
    %225 = vmatpush.msra.mxu0 0.0
    %226 = vmatpush.msra.mxu0 0.0
    %227 = vmatpush.msra.mxu0 0.0
    %228 = vmatpush.msra.mxu0 0.0
    %229 = vmatpush.msra.mxu0 0.0
    %230 = vmatpush.msra.mxu0 0.0
    %231 = vmatpush.msra.mxu0 %v168
    %232 = vmatpush.msra.mxu0 %v167
    %233 = vmatpush.msra.mxu0 %v166
    %234 = vmatpush.msra.mxu0 %v165
    %235 = vmatmul.f32.gmra.mxu0 %v217
    %v236 = vpop.f32.mrf.mxu0
    %v237 = vadd.f32 0.0, %v236
    %238 = vdwg.mxu0
    %v240 = vrot.slane %v237, 4
    %v242 = vadd.f32 %v202, %v240
    %v243 = vtanh.pop %v242
    %v245 = vrot.slane %v243, 4
    %v246 = vsel %vm171, %v245, 0
    %248 = vmatpush.msra.mxu0 0.0
    %249 = vmatpush.msra.mxu0 0.0
    %250 = vmatpush.msra.mxu0 0.0
    %251 = vmatpush.msra.mxu0 0.0
    %252 = vmatpush.msra.mxu0 0.0
    %253 = vmatpush.msra.mxu0 0.0
    %254 = vmatpush.msra.mxu0 0.0
    %255 = vmatpush.msra.mxu0 0.0
    %256 = vmatpush.msra.mxu0 0.0
    %257 = vmatpush.msra.mxu0 0.0
    %258 = vmatpush.msra.mxu0 0.0
    %259 = vmatpush.msra.mxu0 0.0
    %260 = vmatpush.msra.mxu0 %v168
    %261 = vmatpush.msra.mxu0 %v167
    %262 = vmatpush.msra.mxu0 %v166
    %263 = vmatpush.msra.mxu0 %v165
    %264 = vmatmul.f32.gmra.mxu0 %v246
    %v265 = vpop.f32.mrf.mxu0
    %v266 = vadd.f32 0.0, %v265
    %267 = vdwg.mxu0
    %v269 = vrot.slane %v266, 4
    %v271 = vadd.f32 %v202, %v269
    %v272 = vtanh.pop %v271
    %v274 = vrot.slane %v272, 4
    %v275 = vsel %vm171, %v274, 0
    %277 = vmatpush.msra.mxu0 0.0
    %278 = vmatpush.msra.mxu0 0.0
    %279 = vmatpush.msra.mxu0 0.0
    %280 = vmatpush.msra.mxu0 0.0
    %281 = vmatpush.msra.mxu0 0.0
    %282 = vmatpush.msra.mxu0 0.0
    %283 = vmatpush.msra.mxu0 0.0
    %284 = vmatpush.msra.mxu0 0.0
    %285 = vmatpush.msra.mxu0 0.0
    %286 = vmatpush.msra.mxu0 0.0
    %287 = vmatpush.msra.mxu0 0.0
    %288 = vmatpush.msra.mxu0 0.0
    %289 = vmatpush.msra.mxu0 %v168
    %290 = vmatpush.msra.mxu0 %v167
    %291 = vmatpush.msra.mxu0 %v166
    %292 = vmatpush.msra.mxu0 %v165
    %293 = vmatmul.f32.gmra.mxu0 %v275
    %v294 = vpop.f32.mrf.mxu0
    %v295 = vadd.f32 0.0, %v294
    %296 = vdwg.mxu0
    %v298 = vrot.slane %v295, 4
    %v300 = vadd.f32 %v202, %v298
    %v301 = vtanh.pop %v300
    %303 = vst.sshfl [vmem:[#allocation1] sm:$0xff pattern:$0x75316420] %v301
    %s304 = scalar_lea.vmem [#allocation1], 1
    %v305 = vld [vmem:[%s304] ss:$2 sm:$0xff]
    %306 = vrot.lane.b32.xlu0 %v305, 32
    %v307 = vpop.permute.xlu0 %306
    %vm309 = vcmask 519424
    %310 = vst.msk [vmem:[#allocation6] sm:$0xf] %vm309, %v307
    %v311 = vrot.slane %v301, 4
    %v312 = vsel %vm171, %v311, 0
    %314 = vmatpush.msra.mxu0 0.0
    %315 = vmatpush.msra.mxu0 0.0
    %316 = vmatpush.msra.mxu0 0.0
    %317 = vmatpush.msra.mxu0 0.0
    %318 = vmatpush.msra.mxu0 0.0
    %319 = vmatpush.msra.mxu0 0.0
    %320 = vmatpush.msra.mxu0 0.0
    %321 = vmatpush.msra.mxu0 0.0
    %322 = vmatpush.msra.mxu0 0.0
    %323 = vmatpush.msra.mxu0 0.0
    %324 = vmatpush.msra.mxu0 0.0
    %325 = vmatpush.msra.mxu0 0.0
    %326 = vmatpush.msra.mxu0 %v168
    %327 = vmatpush.msra.mxu0 %v167
    %328 = vmatpush.msra.mxu0 %v166
    %329 = vmatpush.msra.mxu0 %v165
    %330 = vmatmul.f32.gmra.mxu0 %v312
    %v331 = vpop.f32.mrf.mxu0
    %v332 = vadd.f32 0.0, %v331
    %333 = vdwg.mxu0
    %v334 = vadd.f32 %v205, %v332
    %v335 = vtanh.pop %v334
    %v337 = vsel %vm171, %v335, 0
    %339 = vmatpush.msra.mxu0 0.0
    %340 = vmatpush.msra.mxu0 0.0
    %341 = vmatpush.msra.mxu0 0.0
    %342 = vmatpush.msra.mxu0 0.0
    %343 = vmatpush.msra.mxu0 0.0
    %344 = vmatpush.msra.mxu0 0.0
    %345 = vmatpush.msra.mxu0 0.0
    %346 = vmatpush.msra.mxu0 0.0
    %347 = vmatpush.msra.mxu0 0.0
    %348 = vmatpush.msra.mxu0 0.0
    %349 = vmatpush.msra.mxu0 0.0
    %350 = vmatpush.msra.mxu0 0.0
    %351 = vmatpush.msra.mxu0 %v168
    %352 = vmatpush.msra.mxu0 %v167
    %353 = vmatpush.msra.mxu0 %v166
    %354 = vmatpush.msra.mxu0 %v165
    %355 = vmatmul.f32.gmra.mxu0 %v337
    %v356 = vpop.f32.mrf.mxu0
    %v357 = vadd.f32 0.0, %v356
    %358 = vdwg.mxu0
    %v359 = vadd.f32 %v205, %v357
    %v360 = vtanh.pop %v359
    %v362 = vsel %vm171, %v360, 0
    %364 = vmatpush.msra.mxu0 0.0
    %365 = vmatpush.msra.mxu0 0.0
    %366 = vmatpush.msra.mxu0 0.0
    %367 = vmatpush.msra.mxu0 0.0
    %368 = vmatpush.msra.mxu0 0.0
    %369 = vmatpush.msra.mxu0 0.0
    %370 = vmatpush.msra.mxu0 0.0
    %371 = vmatpush.msra.mxu0 0.0
    %372 = vmatpush.msra.mxu0 0.0
    %373 = vmatpush.msra.mxu0 0.0
    %374 = vmatpush.msra.mxu0 0.0
    %375 = vmatpush.msra.mxu0 0.0
    %376 = vmatpush.msra.mxu0 %v168
    %377 = vmatpush.msra.mxu0 %v167
    %378 = vmatpush.msra.mxu0 %v166
    %379 = vmatpush.msra.mxu0 %v165
    %380 = vmatmul.f32.gmra.mxu0 %v362
    %v381 = vpop.f32.mrf.mxu0
    %v382 = vadd.f32 0.0, %v381
    %383 = vdwg.mxu0
    %v384 = vadd.f32 %v205, %v382
    %v385 = vtanh.pop %v384
    %387 = vrot.lane.b32.xlu0 %v385, 64
    %v388 = vpop.permute.xlu0 %387
    %vm390 = vcmask 781824
    %391 = vst.msk [vmem:[#allocation6] sm:$0xf] %vm390, %v388
    %v392 = vsel %vm171, %v385, 0
    %394 = vmatpush.msra.mxu0 0.0
    %395 = vmatpush.msra.mxu0 0.0
    %396 = vmatpush.msra.mxu0 0.0
    %397 = vmatpush.msra.mxu0 0.0
    %398 = vmatpush.msra.mxu0 0.0
    %399 = vmatpush.msra.mxu0 0.0
    %400 = vmatpush.msra.mxu0 0.0
    %401 = vmatpush.msra.mxu0 0.0
    %402 = vmatpush.msra.mxu0 0.0
    %403 = vmatpush.msra.mxu0 0.0
    %404 = vmatpush.msra.mxu0 0.0
    %405 = vmatpush.msra.mxu0 0.0
    %406 = vmatpush.msra.mxu0 %v168
    %407 = vmatpush.msra.mxu0 %v167
    %408 = vmatpush.msra.mxu0 %v166
    %409 = vmatpush.msra.mxu0 %v165
    %410 = vmatmul.f32.gmra.mxu0 %v392
    %v411 = vpop.f32.mrf.mxu0
    %v412 = vadd.f32 0.0, %v411
    %413 = vdwg.mxu0
    %v415 = vrot.slane %v412, 4
    %v417 = vadd.f32 %v205, %v415
    %v418 = vtanh.pop %v417
    %v420 = vrot.slane %v418, 4
    %v421 = vsel %vm171, %v420, 0
    %423 = vmatpush.msra.mxu0 0.0
    %424 = vmatpush.msra.mxu0 0.0
    %425 = vmatpush.msra.mxu0 0.0
    %426 = vmatpush.msra.mxu0 0.0
    %427 = vmatpush.msra.mxu0 0.0
    %428 = vmatpush.msra.mxu0 0.0
    %429 = vmatpush.msra.mxu0 0.0
    %430 = vmatpush.msra.mxu0 0.0
    %431 = vmatpush.msra.mxu0 0.0
    %432 = vmatpush.msra.mxu0 0.0
    %433 = vmatpush.msra.mxu0 0.0
    %434 = vmatpush.msra.mxu0 0.0
    %435 = vmatpush.msra.mxu0 %v168
    %436 = vmatpush.msra.mxu0 %v167
    %437 = vmatpush.msra.mxu0 %v166
    %438 = vmatpush.msra.mxu0 %v165
    %439 = vmatmul.f32.gmra.mxu0 %v421
    %v440 = vpop.f32.mrf.mxu0
    %v441 = vadd.f32 0.0, %v440
    %442 = vdwg.mxu0
    %v444 = vrot.slane %v441, 4
    %v446 = vadd.f32 %v205, %v444
    %v447 = vtanh.pop %v446
    %v449 = vrot.slane %v447, 4
    %v450 = vsel %vm171, %v449, 0
    %452 = vmatpush.msra.mxu0 0.0
    %453 = vmatpush.msra.mxu0 0.0
    %454 = vmatpush.msra.mxu0 0.0
    %455 = vmatpush.msra.mxu0 0.0
    %456 = vmatpush.msra.mxu0 0.0
    %457 = vmatpush.msra.mxu0 0.0
    %458 = vmatpush.msra.mxu0 0.0
    %459 = vmatpush.msra.mxu0 0.0
    %460 = vmatpush.msra.mxu0 0.0
    %461 = vmatpush.msra.mxu0 0.0
    %462 = vmatpush.msra.mxu0 0.0
    %463 = vmatpush.msra.mxu0 0.0
    %464 = vmatpush.msra.mxu0 %v168
    %465 = vmatpush.msra.mxu0 %v167
    %466 = vmatpush.msra.mxu0 %v166
    %467 = vmatpush.msra.mxu0 %v165
    %468 = vmatmul.f32.gmra.mxu0 %v450
    %v469 = vpop.f32.mrf.mxu0
    %v470 = vadd.f32 0.0, %v469
    %471 = vdwg.mxu0
    %v473 = vrot.slane %v470, 4
    %v475 = vadd.f32 %v205, %v473
    %v476 = vtanh.pop %v475
    %478 = vst.sshfl [vmem:[#allocation1] sm:$0xff pattern:$0x75316420] %v476
    %s479 = scalar_lea.vmem [#allocation1], 1
    %v480 = vld [vmem:[%s479] ss:$2 sm:$0xff]
    %481 = vrot.lane.b32.xlu0 %v480, 96
    %v482 = vpop.permute.xlu0 %481
    %vm484 = vcmask 1044224
    %485 = vst.msk [vmem:[#allocation6] sm:$0xf] %vm484, %v482
    %v486 = vrot.slane %v476, 4
    %v487 = vsel %vm171, %v486, 0
    %489 = vmatpush.msra.mxu0 0.0
    %490 = vmatpush.msra.mxu0 0.0
    %491 = vmatpush.msra.mxu0 0.0
    %492 = vmatpush.msra.mxu0 0.0
    %493 = vmatpush.msra.mxu0 0.0
    %494 = vmatpush.msra.mxu0 0.0
    %495 = vmatpush.msra.mxu0 0.0
    %496 = vmatpush.msra.mxu0 0.0
    %497 = vmatpush.msra.mxu0 0.0
    %498 = vmatpush.msra.mxu0 0.0
    %499 = vmatpush.msra.mxu0 0.0
    %500 = vmatpush.msra.mxu0 0.0
    %501 = vmatpush.msra.mxu0 %v168
    %502 = vmatpush.msra.mxu0 %v167
    %503 = vmatpush.msra.mxu0 %v166
    %504 = vmatpush.msra.mxu0 %v165
    %505 = vmatmul.f32.gmra.mxu0 %v487
    %v506 = vpop.f32.mrf.mxu0
    %v507 = vadd.f32 0.0, %v506
    %508 = vdwg.mxu0
    %v509 = vadd.f32 %v208, %v507
    %v510 = vtanh.pop %v509
    %v512 = vsel %vm171, %v510, 0
    %514 = vmatpush.msra.mxu0 0.0
    %515 = vmatpush.msra.mxu0 0.0
    %516 = vmatpush.msra.mxu0 0.0
    %517 = vmatpush.msra.mxu0 0.0
    %518 = vmatpush.msra.mxu0 0.0
    %519 = vmatpush.msra.mxu0 0.0
    %520 = vmatpush.msra.mxu0 0.0
    %521 = vmatpush.msra.mxu0 0.0
    %522 = vmatpush.msra.mxu0 0.0
    %523 = vmatpush.msra.mxu0 0.0
    %524 = vmatpush.msra.mxu0 0.0
    %525 = vmatpush.msra.mxu0 0.0
    %526 = vmatpush.msra.mxu0 %v168
    %527 = vmatpush.msra.mxu0 %v167
    %528 = vmatpush.msra.mxu0 %v166
    %529 = vmatpush.msra.mxu0 %v165
    %530 = vmatmul.f32.gmra.mxu0 %v512
    %v531 = vpop.f32.mrf.mxu0
    %v532 = vadd.f32 0.0, %v531
    %533 = vdwg.mxu0
    %v534 = vadd.f32 %v208, %v532
    %v535 = vtanh.pop %v534
    %v537 = vsel %vm171, %v535, 0
    %539 = vmatpush.msra.mxu0 0.0
    %540 = vmatpush.msra.mxu0 0.0
    %541 = vmatpush.msra.mxu0 0.0
    %542 = vmatpush.msra.mxu0 0.0
    %543 = vmatpush.msra.mxu0 0.0
    %544 = vmatpush.msra.mxu0 0.0
    %545 = vmatpush.msra.mxu0 0.0
    %546 = vmatpush.msra.mxu0 0.0
    %547 = vmatpush.msra.mxu0 0.0
    %548 = vmatpush.msra.mxu0 0.0
    %549 = vmatpush.msra.mxu0 0.0
    %550 = vmatpush.msra.mxu0 0.0
    %551 = vmatpush.msra.mxu0 %v168
    %552 = vmatpush.msra.mxu0 %v167
    %553 = vmatpush.msra.mxu0 %v166
    %554 = vmatpush.msra.mxu0 %v165
    %555 = vmatmul.f32.gmra.mxu0 %v537
    %v556 = vpop.f32.mrf.mxu0
    %v557 = vadd.f32 0.0, %v556
    %558 = vdwg.mxu0
    %v559 = vadd.f32 %v208, %v557
    %v560 = vtanh.pop %v559
    %561 = vst.msk [vmem:[#allocation6 + $0x4] sm:$0xf] %vm214, %v560
    %v563 = vsel %vm171, %v560, 0
    %565 = vmatpush.msra.mxu0 0.0
    %566 = vmatpush.msra.mxu0 0.0
    %567 = vmatpush.msra.mxu0 0.0
    %568 = vmatpush.msra.mxu0 0.0
    %569 = vmatpush.msra.mxu0 0.0
    %570 = vmatpush.msra.mxu0 0.0
    %571 = vmatpush.msra.mxu0 0.0
    %572 = vmatpush.msra.mxu0 0.0
    %573 = vmatpush.msra.mxu0 0.0
    %574 = vmatpush.msra.mxu0 0.0
    %575 = vmatpush.msra.mxu0 0.0
    %576 = vmatpush.msra.mxu0 0.0
    %577 = vmatpush.msra.mxu0 %v168
    %578 = vmatpush.msra.mxu0 %v167
    %579 = vmatpush.msra.mxu0 %v166
    %580 = vmatpush.msra.mxu0 %v165
    %581 = vmatmul.f32.gmra.mxu0 %v563
    %v582 = vpop.f32.mrf.mxu0
    %v583 = vadd.f32 0.0, %v582
    %584 = vdwg.mxu0
    %v586 = vrot.slane %v583, 4
    %v588 = vadd.f32 %v208, %v586
    %v589 = vtanh.pop %v588
    %v591 = vrot.slane %v589, 4
    %v592 = vsel %vm171, %v591, 0
    %594 = vmatpush.msra.mxu0 0.0
    %595 = vmatpush.msra.mxu0 0.0
    %596 = vmatpush.msra.mxu0 0.0
    %597 = vmatpush.msra.mxu0 0.0
    %598 = vmatpush.msra.mxu0 0.0
    %599 = vmatpush.msra.mxu0 0.0
    %600 = vmatpush.msra.mxu0 0.0
    %601 = vmatpush.msra.mxu0 0.0
    %602 = vmatpush.msra.mxu0 0.0
    %603 = vmatpush.msra.mxu0 0.0
    %604 = vmatpush.msra.mxu0 0.0
    %605 = vmatpush.msra.mxu0 0.0
    %606 = vmatpush.msra.mxu0 %v168
    %607 = vmatpush.msra.mxu0 %v167
    %608 = vmatpush.msra.mxu0 %v166
    %609 = vmatpush.msra.mxu0 %v165
    %610 = vmatmul.f32.gmra.mxu0 %v592
    %v611 = vpop.f32.mrf.mxu0
    %v612 = vadd.f32 0.0, %v611
    %613 = vdwg.mxu0
    %v615 = vrot.slane %v612, 4
    %v617 = vadd.f32 %v208, %v615
    %v618 = vtanh.pop %v617
    %v620 = vrot.slane %v618, 4
    %v621 = vsel %vm171, %v620, 0
    %623 = vmatpush.msra.mxu0 0.0
    %624 = vmatpush.msra.mxu0 0.0
    %625 = vmatpush.msra.mxu0 0.0
    %626 = vmatpush.msra.mxu0 0.0
    %627 = vmatpush.msra.mxu0 0.0
    %628 = vmatpush.msra.mxu0 0.0
    %629 = vmatpush.msra.mxu0 0.0
    %630 = vmatpush.msra.mxu0 0.0
    %631 = vmatpush.msra.mxu0 0.0
    %632 = vmatpush.msra.mxu0 0.0
    %633 = vmatpush.msra.mxu0 0.0
    %634 = vmatpush.msra.mxu0 0.0
    %635 = vmatpush.msra.mxu0 %v168
    %636 = vmatpush.msra.mxu0 %v167
    %637 = vmatpush.msra.mxu0 %v166
    %638 = vmatpush.msra.mxu0 %v165
    %639 = vmatmul.f32.gmra.mxu0 %v621
    %v640 = vpop.f32.mrf.mxu0
    %v641 = vadd.f32 0.0, %v640
    %642 = vdwg.mxu0
    %v644 = vrot.slane %v641, 4
    %v646 = vadd.f32 %v208, %v644
    %v647 = vtanh.pop %v646
    %649 = vst.sshfl [vmem:[#allocation1] sm:$0xff pattern:$0x75316420] %v647
    %s650 = scalar_lea.vmem [#allocation1], 1
    %v651 = vld [vmem:[%s650] ss:$2 sm:$0xff]
    %652 = vrot.lane.b32.xlu0 %v651, 32
    %v653 = vpop.permute.xlu0 %652
    %655 = vst.msk [vmem:[#allocation6 + $0x4] sm:$0xf] %vm309, %v653
    %v656 = vrot.slane %v647, 4
    %v657 = vsel %vm171, %v656, 0
    %659 = vmatpush.msra.mxu0 0.0
    %660 = vmatpush.msra.mxu0 0.0
    %661 = vmatpush.msra.mxu0 0.0
    %662 = vmatpush.msra.mxu0 0.0
    %663 = vmatpush.msra.mxu0 0.0
    %664 = vmatpush.msra.mxu0 0.0
    %665 = vmatpush.msra.mxu0 0.0
    %666 = vmatpush.msra.mxu0 0.0
    %667 = vmatpush.msra.mxu0 0.0
    %668 = vmatpush.msra.mxu0 0.0
    %669 = vmatpush.msra.mxu0 0.0
    %670 = vmatpush.msra.mxu0 0.0
    %671 = vmatpush.msra.mxu0 %v168
    %672 = vmatpush.msra.mxu0 %v167
    %673 = vmatpush.msra.mxu0 %v166
    %674 = vmatpush.msra.mxu0 %v165
    %675 = vmatmul.f32.gmra.mxu0 %v657
    %v676 = vpop.f32.mrf.mxu0
    %v677 = vadd.f32 0.0, %v676
    %678 = vdwg.mxu0
    %v679 = vadd.f32 %v211, %v677
    %v680 = vtanh.pop %v679
    %v682 = vsel %vm171, %v680, 0
    %684 = vmatpush.msra.mxu0 0.0
    %685 = vmatpush.msra.mxu0 0.0
    %686 = vmatpush.msra.mxu0 0.0
    %687 = vmatpush.msra.mxu0 0.0
    %688 = vmatpush.msra.mxu0 0.0
    %689 = vmatpush.msra.mxu0 0.0
    %690 = vmatpush.msra.mxu0 0.0
    %691 = vmatpush.msra.mxu0 0.0
    %692 = vmatpush.msra.mxu0 0.0
    %693 = vmatpush.msra.mxu0 0.0
    %694 = vmatpush.msra.mxu0 0.0
    %695 = vmatpush.msra.mxu0 0.0
    %696 = vmatpush.msra.mxu0 %v168
    %697 = vmatpush.msra.mxu0 %v167
    %698 = vmatpush.msra.mxu0 %v166
    %699 = vmatpush.msra.mxu0 %v165
    %700 = vmatmul.f32.gmra.mxu0 %v682
    %v701 = vpop.f32.mrf.mxu0
    %v702 = vadd.f32 0.0, %v701
    %703 = vdwg.mxu0
    %v704 = vadd.f32 %v211, %v702
    %v705 = vtanh.pop %v704
    %v707 = vsel %vm171, %v705, 0
    %709 = vmatpush.msra.mxu0 0.0
    %710 = vmatpush.msra.mxu0 0.0
    %711 = vmatpush.msra.mxu0 0.0
    %712 = vmatpush.msra.mxu0 0.0
    %713 = vmatpush.msra.mxu0 0.0
    %714 = vmatpush.msra.mxu0 0.0
    %715 = vmatpush.msra.mxu0 0.0
    %716 = vmatpush.msra.mxu0 0.0
    %717 = vmatpush.msra.mxu0 0.0
    %718 = vmatpush.msra.mxu0 0.0
    %719 = vmatpush.msra.mxu0 0.0
    %720 = vmatpush.msra.mxu0 0.0
    %721 = vmatpush.msra.mxu0 %v168
    %722 = vmatpush.msra.mxu0 %v167
    %723 = vmatpush.msra.mxu0 %v166
    %724 = vmatpush.msra.mxu0 %v165
    %725 = vmatmul.f32.gmra.mxu0 %v707
    %v726 = vpop.f32.mrf.mxu0
    %v727 = vadd.f32 0.0, %v726
    %728 = vdwg.mxu0
    %v729 = vadd.f32 %v211, %v727
    %v730 = vtanh.pop %v729
    %732 = vrot.lane.b32.xlu0 %v730, 64
    %v733 = vpop.permute.xlu0 %732
    %735 = vst.msk [vmem:[#allocation6 + $0x4] sm:$0xf] %vm390, %v733
    %v736 = vsel %vm171, %v730, 0
    %738 = vmatpush.msra.mxu0 0.0
    %739 = vmatpush.msra.mxu0 0.0
    %740 = vmatpush.msra.mxu0 0.0
    %741 = vmatpush.msra.mxu0 0.0
    %742 = vmatpush.msra.mxu0 0.0
    %743 = vmatpush.msra.mxu0 0.0
    %744 = vmatpush.msra.mxu0 0.0
    %745 = vmatpush.msra.mxu0 0.0
    %746 = vmatpush.msra.mxu0 0.0
    %747 = vmatpush.msra.mxu0 0.0
    %748 = vmatpush.msra.mxu0 0.0
    %749 = vmatpush.msra.mxu0 0.0
    %750 = vmatpush.msra.mxu0 %v168
    %751 = vmatpush.msra.mxu0 %v167
    %752 = vmatpush.msra.mxu0 %v166
    %753 = vmatpush.msra.mxu0 %v165
    %754 = vmatmul.f32.gmra.mxu0 %v736
    %v755 = vpop.f32.mrf.mxu0
    %v756 = vadd.f32 0.0, %v755
    %757 = vdwg.mxu0
    %v759 = vrot.slane %v756, 4
    %v761 = vadd.f32 %v211, %v759
    %v762 = vtanh.pop %v761
    %v764 = vrot.slane %v762, 4
    %v765 = vsel %vm171, %v764, 0
    %767 = vmatpush.msra.mxu0 0.0
    %768 = vmatpush.msra.mxu0 0.0
    %769 = vmatpush.msra.mxu0 0.0
    %770 = vmatpush.msra.mxu0 0.0
    %771 = vmatpush.msra.mxu0 0.0
    %772 = vmatpush.msra.mxu0 0.0
    %773 = vmatpush.msra.mxu0 0.0
    %774 = vmatpush.msra.mxu0 0.0
    %775 = vmatpush.msra.mxu0 0.0
    %776 = vmatpush.msra.mxu0 0.0
    %777 = vmatpush.msra.mxu0 0.0
    %778 = vmatpush.msra.mxu0 0.0
    %779 = vmatpush.msra.mxu0 %v168
    %780 = vmatpush.msra.mxu0 %v167
    %781 = vmatpush.msra.mxu0 %v166
    %782 = vmatpush.msra.mxu0 %v165
    %783 = vmatmul.f32.gmra.mxu0 %v765
    %v784 = vpop.f32.mrf.mxu0
    %v785 = vadd.f32 0.0, %v784
    %786 = vdwg.mxu0
    %v788 = vrot.slane %v785, 4
    %v790 = vadd.f32 %v211, %v788
    %v791 = vtanh.pop %v790
    %v793 = vrot.slane %v791, 4
    %v794 = vsel %vm171, %v793, 0
    %796 = vmatpush.msra.mxu0 0.0
    %797 = vmatpush.msra.mxu0 0.0
    %798 = vmatpush.msra.mxu0 0.0
    %799 = vmatpush.msra.mxu0 0.0
    %800 = vmatpush.msra.mxu0 0.0
    %801 = vmatpush.msra.mxu0 0.0
    %802 = vmatpush.msra.mxu0 0.0
    %803 = vmatpush.msra.mxu0 0.0
    %804 = vmatpush.msra.mxu0 0.0
    %805 = vmatpush.msra.mxu0 0.0
    %806 = vmatpush.msra.mxu0 0.0
    %807 = vmatpush.msra.mxu0 0.0
    %808 = vmatpush.msra.mxu0 %v168
    %809 = vmatpush.msra.mxu0 %v167
    %810 = vmatpush.msra.mxu0 %v166
    %811 = vmatpush.msra.mxu0 %v165
    %812 = vmatmul.f32.gmra.mxu0 %v794
    %v813 = vpop.f32.mrf.mxu0
    %v814 = vadd.f32 0.0, %v813
    %815 = vdwg.mxu0
    %v817 = vrot.slane %v814, 4
    %v819 = vadd.f32 %v211, %v817
    %v820 = vtanh.pop %v819
    %822 = vst.sshfl [vmem:[#allocation1] sm:$0xff pattern:$0x75316420] %v820
    %s823 = scalar_lea.vmem [#allocation1], 1
    %v824 = vld [vmem:[%s823] ss:$2 sm:$0xff]
    %825 = vrot.lane.b32.xlu0 %v824, 96
    %v826 = vpop.permute.xlu0 %825
    %828 = vst.msk [vmem:[#allocation6 + $0x4] sm:$0xf] %vm484, %v826
    %v829 = vld [vmem:[%s1 + $0x80] sm:$0xff]
    %v830 = vld [vmem:[%s1 + $0x88] sm:$0xff]
    %v831 = vld [vmem:[%s1 + $0x90] sm:$0xff]
    %v832 = vld [vmem:[%s1 + $0x98] sm:$0xff]
    %v833 = vld [vmem:[%s1 + $0xa0] sm:$0x1]
    %v834 = vperm.slane %v833, 0
    %v835 = vrot.slane %v820, 4
    %v836 = vsel %vm171, %v835, 0
    %838 = vmatpush.msra.mxu0 0.0
    %839 = vmatpush.msra.mxu0 0.0
    %840 = vmatpush.msra.mxu0 0.0
    %841 = vmatpush.msra.mxu0 0.0
    %842 = vmatpush.msra.mxu0 0.0
    %843 = vmatpush.msra.mxu0 0.0
    %844 = vmatpush.msra.mxu0 0.0
    %845 = vmatpush.msra.mxu0 0.0
    %846 = vmatpush.msra.mxu0 0.0
    %847 = vmatpush.msra.mxu0 0.0
    %848 = vmatpush.msra.mxu0 0.0
    %849 = vmatpush.msra.mxu0 0.0
    %850 = vmatpush.msra.mxu0 %v832
    %851 = vmatpush.msra.mxu0 %v831
    %852 = vmatpush.msra.mxu0 %v830
    %853 = vmatpush.msra.mxu0 %v829
    %854 = vmatmul.f32.gmra.mxu0 %v836
    %v855 = vpop.f32.mrf.mxu0
    %v856 = vadd.f32 %v834, %v855
    %857 = vdwg.mxu0
    %vm858 = vcmask 60416
    %859 = vst.msk [vmem:[#allocation7] sm:$0xf] %vm858, %v856
    // Predicated region
    $region14: #{rnn_forward.1} parent=1 // pred_check
      _
    $region15: #{rnn_forward.1} parent=1 // pred_check_branch
      %861 = sbr.rel (0) target = $region17
    $region16: #{rnn_forward.1} parent=1 // pred_region
      %863 = vsyncadd [#allocation4], 0
      %s865 = sshll.u32 [#allocation6], 4
      %s866 = int_to_ptr.vmem [resolvable:$true] %s865
      %s867 = sshll.u32 %s2, 4
      %s868 = int_to_ptr.hbm [resolvable:$true] %s867
      %870 = dma.vmem_to_hbm [thread:$0]  %s866, 128, %s868, [#allocation4]
    $region17: #{rnn_forward.1} parent=1 // pred_fallthru
      _
    // Predicated region
    $region18: #{rnn_forward.1} parent=1 // pred_check
      _
    $region19: #{rnn_forward.1} parent=1 // pred_check_branch
      %872 = sbr.rel (0) target = $region21
    $region20: #{rnn_forward.1} parent=1 // pred_region
      %874 = vsyncadd [#allocation8], 0
      %s876 = sshll.u32 [#allocation7], 4
      %s877 = int_to_ptr.vmem [resolvable:$true] %s876
      %s878 = sshll.u32 %s3, 4
      %s879 = int_to_ptr.hbm [resolvable:$true] %s878
      %881 = dma.vmem_to_hbm [thread:$0]  %s877, 64, %s879, [#allocation8]
    $region21: #{rnn_forward.1} parent=1 // pred_fallthru
      _
    // Predicated region
    $region22: #{rnn_forward.1} parent=1 // pred_check
      _
    $region23: #{rnn_forward.1} parent=1 // pred_check_branch
      %883 = sbr.rel (0) target = $region25
    $region24: #{rnn_forward.1} parent=1 // pred_region
      %885 = dma.done [#allocation4], 128
    $region25: #{rnn_forward.1} parent=1 // pred_fallthru
      _
    // Predicated region
    $region26: #{rnn_forward.1} parent=1 // pred_check
      _
    $region27: #{rnn_forward.1} parent=1 // pred_check_branch
      %887 = sbr.rel (0) target = $region29
    $region28: #{rnn_forward.1} parent=1 // pred_region
      %889 = dma.done [#allocation8], 64
    $region29: #{rnn_forward.1} parent=1 // pred_fallthru
      _
    %890 = vsyncpa [#allocation4], 1
    %891 = vsyncpa [#allocation8], 1
    %892 = vsyncpa [#allocation5], 1

</llo_original>
